<compile_context>
chip_gen: v5e
topology: v5e:2x2
jax: 0.10.0
libtpu: 0.0.40
codegen_flags: <defaults>
</compile_context>

<pallas_src>
import functools

import jax
import jax.numpy as jnp
import numpy as np
from jax.experimental import pallas as pl
from jax.experimental.pallas import tpu as pltpu


def _round_up(x, m):
    return (x + m - 1) // m * m


_F_CHUNK = 2048   # image-feature (K) chunk size when F is too large for VMEM


def _vmem_estimate(bt, fk, d, h, n_pad, csz):
    """Rough VMEM bytes for one batch tile: double-buffered streamed inputs,
    single-buffered constant weights, f32 scratch."""
    return (bt * 2 * d * csz * 2            # pooled-text tile
            + 3 * bt * fk * csz * 2         # image-pixel K-chunk tile
            + fk * d * csz * 2              # proj K-chunk
            + 5 * d * h * csz               # w1 (Buffered(1))
            + h * 4                         # b1
            + h * n_pad * csz               # w2 (Buffered(1))
            + n_pad * 4                     # b2
            + bt * n_pad * 4 * 2            # output tile
            + 3 * bt * d * 4                # image-embedding f32 accumulator
            + bt * 5 * d * 4)               # concat-embedding f32 scratch


def _choose_bt(B, fk, d, h, n_pad, csz):
    """Batch tile: fits a ~40 MiB budget (headroom inside v7x's 64 MiB VMEM),
    capped at 128 (so B >= 256 yields >= 2 'parallel' tiles for v7x's two
    TensorCores), and chosen to minimize tail padding."""
    budget = 40 * 2 ** 20
    b8 = _round_up(max(B, 1), 8)
    if b8 <= 128:
        cands = [b8]                 # single tile covers the whole (small) batch
    else:
        cands = [128, 64]
    best, best_key = 8, None
    for bt in cands:
        if _vmem_estimate(bt, fk, d, h, n_pad, csz) > budget:
            continue
        key = (_round_up(B, bt) - B, -bt)    # min padding, then larger tile
        if best_key is None or key < best_key:
            best, best_key = bt, key
    return best


# -----------------------------------------------------------------------------
# Fused kernel: image projection (F-chunked) + classifier head.
# -----------------------------------------------------------------------------
def _fused_colearn_kernel(txt_ref, imgs_ref, proj_ref, w1_ref, b1_ref,
                          w2_ref, b2_ref, out_ref, acc_ref, emb_ref):
    # txt_ref : [BT, 2D]    mean-pooled (txt_1 | txt_2) embeddings, compute dtype
    # imgs_ref: [3, BT, FK] flattened-pixel K-chunk for (img_1, img_2, img_3)
    # proj_ref: [FK, D]     encode_image projection K-chunk, compute dtype
    # w1_ref  : [5D, H]     b1_ref: [1, H]  (b1 stays f32)
    # w2_ref  : [H, Np]     b2_ref: [1, Np] (Np = n_out padded to 128, b2 f32)
    # out_ref : [BT, Np]    f32
    # acc_ref : [3, BT, D]  f32 image-embedding accumulator (lives across k)
    # emb_ref : [BT, 5D]    f32 lane-concat buffer for the single K=5D head dot
    k = pl.program_id(1)
    d = proj_ref.shape[1]

    @pl.when(k == 0)
    def _init():
        acc_ref[...] = jnp.zeros_like(acc_ref)

    # Image "encoders": accumulate the linear pixel projection over F chunks.
    proj = proj_ref[...]
    acc_ref[0] += jnp.dot(imgs_ref[0], proj, preferred_element_type=jnp.float32)
    acc_ref[1] += jnp.dot(imgs_ref[1], proj, preferred_element_type=jnp.float32)
    acc_ref[2] += jnp.dot(imgs_ref[2], proj, preferred_element_type=jnp.float32)

    # Classifier head on the last F chunk only.
    @pl.when(k == pl.num_programs(1) - 1)
    def _head():
        # Lane-concat the five embeddings and do ONE K=5D matmul against W1
        # (better MXU fill than five K=D dots when D < 128).
        emb_ref[:, 0:2 * d] = txt_ref[...].astype(jnp.float32)
        emb_ref[:, 2 * d:3 * d] = acc_ref[0]
        emb_ref[:, 3 * d:4 * d] = acc_ref[1]
        emb_ref[:, 4 * d:5 * d] = acc_ref[2]
        all_emb = emb_ref[...].astype(w1_ref.dtype)
        h = jnp.dot(all_emb, w1_ref[...], preferred_element_type=jnp.float32)
        h = jnp.maximum(h + b1_ref[...], 0.0)
        out = jnp.dot(h.astype(w2_ref.dtype), w2_ref[...],
                      preferred_element_type=jnp.float32) + b2_ref[...]
        out_ref[...] = out.astype(out_ref.dtype)


# -----------------------------------------------------------------------------
# Full forward (mirrors CLIPIKEA_Colearn.forward) — one pallas_call.
# -----------------------------------------------------------------------------
def clipikea_colearn_forward(params, txt_1, txt_2, img_1, img_2, img_3,
                             compute_dtype=jnp.bfloat16,
                             single_buffer_weights=True):
    """compute_dtype: MXU-operand dtype (bf16 default, ~2x DMA + MXU win);
    pass jnp.float32 to match the module's autocast(enabled=False) numerics
    exactly.  Accumulation is always f32; returned logits are f32."""
    table = params["txt_table"]
    proj = params["img_proj"]
    w1, b1 = params["w1"], params["b1"]
    w2, b2 = params["w2"], params["b2"]

    B = txt_1.shape[0]
    D = table.shape[1]
    F = proj.shape[0]
    H = w1.shape[1]
    n_out = w2.shape[1]
    cdt = np.dtype(compute_dtype)
    csz = cdt.itemsize

    N_pad = _round_up(n_out, 128)                 # lane-dense output
    FK = F if F <= _F_CHUNK else _F_CHUNK         # stream images/proj over F
    F_pad = _round_up(F, FK)
    nk = F_pad // FK
    BT = _choose_bt(B, FK, D, H, N_pad, csz)
    B_pad = _round_up(B, BT)
    nb = B_pad // BT

    # ---- wrapper glue (cheap XLA, fused by jit) ----------------------------
    # Text "encoders": token-embedding mean-pool hoisted OUT of the kernel so
    # the kernel streams [BT, 2D] instead of [2, BT, T, D] tokens.
    t1 = jnp.mean(jnp.take(table, txt_1, axis=0), axis=1)
    t2 = jnp.mean(jnp.take(table, txt_2, axis=0), axis=1)
    txt = jnp.concatenate([t1, t2], axis=1).astype(cdt)           # [B, 2D]
    txt = jnp.pad(txt, ((0, B_pad - B), (0, 0)))

    imgs = jnp.stack([img_1, img_2, img_3]).reshape(3, B, F).astype(cdt)
    imgs = jnp.pad(imgs, ((0, 0), (0, B_pad - B), (0, F_pad - F)))
    projp = jnp.pad(proj.astype(cdt), ((0, F_pad - F), (0, 0)))
    w1c = w1.astype(cdt)
    w2p = jnp.pad(w2.astype(cdt), ((0, 0), (0, N_pad - n_out)))
    b2p = jnp.pad(b2, ((0, 0), (0, N_pad - n_out)))               # f32
    # b1 stays f32.

    # Constant-index weights fetched once -> single-buffer them to save VMEM.
    if single_buffer_weights:
        wt_kwargs = dict(pipeline_mode=pl.Buffered(1))
    else:
        wt_kwargs = {}

    flops = 2 * B_pad * (3 * F_pad * D + 5 * D * H + H * N_pad)
    bytes_accessed = (csz * (B_pad * 2 * D + 3 * B_pad * F_pad + F_pad * D
                             + 5 * D * H + H * N_pad)
                      + 4 * (H + N_pad + B_pad * N_pad))

    # Explicit scoped-VMEM limit: v5e default is 16 MiB; cap at v7x's 64 MiB.
    vmem_limit = int(min(64 * 2 ** 20,
                         max(32 * 2 ** 20,
                             2 * _vmem_estimate(BT, FK, D, H, N_pad, csz))))

    out = pl.pallas_call(
        _fused_colearn_kernel,
        out_shape=jax.ShapeDtypeStruct((B_pad, N_pad), jnp.float32),
        grid=(nb, nk),
        in_specs=[
            pl.BlockSpec((BT, 2 * D), lambda i, k: (i, 0)),          # pooled txt
            pl.BlockSpec((3, BT, FK), lambda i, k: (0, i, k)),       # image pixels
            pl.BlockSpec((FK, D), lambda i, k: (k, 0)),              # img_proj
            pl.BlockSpec((5 * D, H), lambda i, k: (0, 0), **wt_kwargs),   # w1
            pl.BlockSpec((1, H), lambda i, k: (0, 0), **wt_kwargs),       # b1
            pl.BlockSpec((H, N_pad), lambda i, k: (0, 0), **wt_kwargs),   # w2
            pl.BlockSpec((1, N_pad), lambda i, k: (0, 0), **wt_kwargs),   # b2
        ],
        out_specs=pl.BlockSpec((BT, N_pad), lambda i, k: (i, 0)),
        scratch_shapes=[pltpu.VMEM((3, BT, D), jnp.float32),   # image acc
                        pltpu.VMEM((BT, 5 * D), jnp.float32)], # concat buffer
        compiler_params=pltpu.CompilerParams(
            dimension_semantics=("parallel", "arbitrary"),
            vmem_limit_bytes=vmem_limit),
        cost_estimate=pl.CostEstimate(flops=flops, transcendentals=0,
                                      bytes_accessed=bytes_accessed),
    )(txt, imgs, projp, w1c, b1, w2p, b2p)

    return out[:B, :n_out]


# -----------------------------------------------------------------------------
# Pure-JAX reference (matches the original module's math, f32 throughout).
# -----------------------------------------------------------------------------
def reference_forward(params, txt_1, txt_2, img_1, img_2, img_3):
    table = params["txt_table"]
    t1 = jnp.mean(jnp.take(table, txt_1, axis=0), axis=1)
    t2 = jnp.mean(jnp.take(table, txt_2, axis=0), axis=1)
    B = img_1.shape[0]
    i1 = img_1.reshape(B, -1) @ params["img_proj"]
    i2 = img_2.reshape(B, -1) @ params["img_proj"]
    i3 = img_3.reshape(B, -1) @ params["img_proj"]
    all_emb = jnp.concatenate([t1, t2, i1, i2, i3], axis=1)
    h = jnp.maximum(all_emb @ params["w1"] + params["b1"], 0.0)
    return h @ params["w2"] + params["b2"]


if __name__ == "__main__":
    # Small shapes consistent with the module.
    B = 2          # batch
    T = 8          # text sequence length
    C, HW = 4, 16  # image channels / spatial
    D = 32         # embedding_dim
    HID = 256      # combined_fc1 output (fixed by the module)
    N_OUT = 8      # n_out
    VOCAB = 64

    key = jax.random.PRNGKey(0)
    keys = jax.random.split(key, 10)

    params = {
        "txt_table": jax.random.normal(keys[0], (VOCAB, D), jnp.float32) * 0.02,
        "img_proj":  jax.random.normal(keys[1], (C * HW * HW, D), jnp.float32) * 0.02,
        # combined_fc1: Linear(embedding_dim * 5, 256)
        "w1": jax.random.normal(keys[2], (5 * D, HID), jnp.float32) / jnp.sqrt(5.0 * D),
        "b1": jax.random.normal(keys[3], (1, HID), jnp.float32) * 0.01,
        # output_fc: Linear(256, n_out)
        "w2": jax.random.normal(keys[4], (HID, N_OUT), jnp.float32) / jnp.sqrt(float(HID)),
        "b2": jax.random.normal(keys[5], (1, N_OUT), jnp.float32) * 0.01,
    }

    txt_1 = jax.random.randint(keys[6], (B, T), 0, VOCAB, jnp.int32)
    txt_2 = jax.random.randint(keys[7], (B, T), 0, VOCAB, jnp.int32)
    img_1 = jax.random.normal(keys[8], (B, C, HW, HW), jnp.float32)
    img_2 = jax.random.normal(keys[9], (B, C, HW, HW), jnp.float32)
    img_3 = jax.random.normal(jax.random.fold_in(key, 123), (B, C, HW, HW), jnp.float32)

    def run(compute_dtype, single_buffer_weights=True):
        fwd = jax.jit(functools.partial(
            clipikea_colearn_forward,
            compute_dtype=compute_dtype,
            single_buffer_weights=single_buffer_weights))
        return jax.block_until_ready(
            fwd(params, txt_1, txt_2, img_1, img_2, img_3))

    try:
        out_f32 = run(jnp.float32)
        out_bf16 = run(jnp.bfloat16)
    except Exception:
        # TODO(synk): fallback for jax versions that reject pl.Buffered(1) as a
        # BlockSpec pipeline_mode — retry with default double-buffered weights.
        out_f32 = run(jnp.float32, single_buffer_weights=False)
        out_bf16 = run(jnp.bfloat16, single_buffer_weights=False)

    ref = reference_forward(params, txt_1, txt_2, img_1, img_2, img_3)
    assert out_f32.shape == (B, N_OUT)
    assert out_bf16.shape == (B, N_OUT)
    # f32 compute path matches the module's autocast(enabled=False) numerics.
    assert jnp.allclose(out_f32, ref, atol=1e-4, rtol=1e-4), "f32 mismatch vs reference"
    # bf16 MXU-operand path: intentional numerics tradeoff, looser tolerance.
    assert jnp.allclose(out_bf16, ref, atol=6e-2, rtol=6e-2), "bf16 mismatch vs reference"

    print("KERNEL_OK")
</pallas_src>

<mosaic_0001>
module attributes {stable_mosaic.version = 11 : i64} {
  func.func @_fused_colearn_kernel(%arg0: i32, %arg1: i32, %arg2: memref<8x64xf32, #tpu.memory_space<vmem>>, %arg3: memref<3x8x1024xf32, #tpu.memory_space<vmem>>, %arg4: memref<1024x32xf32, #tpu.memory_space<vmem>>, %arg5: memref<160x256xf32, #tpu.memory_space<vmem>>, %arg6: memref<1x256xf32, #tpu.memory_space<vmem>>, %arg7: memref<256x128xf32, #tpu.memory_space<vmem>>, %arg8: memref<1x128xf32, #tpu.memory_space<vmem>>, %arg9: memref<8x128xf32, #tpu.memory_space<vmem>>, %arg10: memref<3x8x32xf32, #tpu.memory_space<vmem>>, %arg11: memref<8x160xf32, #tpu.memory_space<vmem>>) attributes {dimension_semantics = [#tpu.dimension_semantics<parallel>, #tpu.dimension_semantics<arbitrary>], iteration_bounds = array<i64: 1, 1>, scalar_prefetch = 0 : i64, scratch_operands = 2 : i64, tpu.core_type = #tpu.core_type<tc>, window_params = [{transform_indices = @transform_0, window_bounds = array<i64: 8, 64>}, {transform_indices = @transform_1, window_bounds = array<i64: 3, 8, 1024>}, {transform_indices = @transform_2, window_bounds = array<i64: 1024, 32>}, {pipeline_mode = #tpu.pipeline_mode<synchronous>, transform_indices = @transform_3, window_bounds = array<i64: 160, 256>}, {pipeline_mode = #tpu.pipeline_mode<synchronous>, transform_indices = @transform_4, window_bounds = array<i64: 1, 256>}, {pipeline_mode = #tpu.pipeline_mode<synchronous>, transform_indices = @transform_5, window_bounds = array<i64: 256, 128>}, {pipeline_mode = #tpu.pipeline_mode<synchronous>, transform_indices = @transform_6, window_bounds = array<i64: 1, 128>}, {transform_indices = @transform_7, window_bounds = array<i64: 8, 128>}]} {
    %c0_i32 = arith.constant 0 : i32
    %0 = arith.cmpi eq, %arg1, %c0_i32 : i32
    %1 = arith.extui %0 : i1 to i32
    %c0_i32_0 = arith.constant 0 : i32
    %2 = arith.cmpi ne, %1, %c0_i32_0 : i32
    scf.if %2 {
      %cst_31 = arith.constant 0.000000e+00 : f32
      %34 = vector.broadcast %cst_31 : f32 to vector<3x8x32xf32>
      %c0_32 = arith.constant 0 : index
      %c0_33 = arith.constant 0 : index
      %c0_34 = arith.constant 0 : index
      %35 = vector.load %arg10[%c0_32, %c0_33, %c0_34] : memref<3x8x32xf32, #tpu.memory_space<vmem>>, vector<3x8x32xf32>
      tpu.vector_store %arg10[%c0_32, %c0_33, %c0_34], %34 {strides = array<i32>} : memref<3x8x32xf32, #tpu.memory_space<vmem>>, vector<3x8x32xf32>,
    } else {
    }
    %c0 = arith.constant 0 : index
    %c0_1 = arith.constant 0 : index
    %3 = vector.load %arg4[%c0, %c0_1] : memref<1024x32xf32, #tpu.memory_space<vmem>>, vector<1024x32xf32>
    %c0_2 = arith.constant 0 : index
    %c0_3 = arith.constant 0 : index
    %c0_4 = arith.constant 0 : index
    %4 = vector.load %arg10[%c0_2, %c0_3, %c0_4] : memref<3x8x32xf32, #tpu.memory_space<vmem>>, vector<1x8x32xf32>
    %5 = vector.shape_cast %4 : vector<1x8x32xf32> to vector<8x32xf32>
    %c0_5 = arith.constant 0 : index
    %c0_6 = arith.constant 0 : index
    %c0_7 = arith.constant 0 : index
    %6 = vector.load %arg3[%c0_5, %c0_6, %c0_7] : memref<3x8x1024xf32, #tpu.memory_space<vmem>>, vector<1x8x1024xf32>
    %7 = vector.shape_cast %6 : vector<1x8x1024xf32> to vector<8x1024xf32>
    %cst = arith.constant dense<0.000000e+00> : vector<8x32xf32>
    %8 = tpu.matmul %7, %3, %cst {dimension_numbers = #tpu.dot_dimension_numbers<[1], [0], [0], [1], [0, 0, 1, 1], [], []>} : vector<8x1024xf32>, vector<1024x32xf32>, vector<8x32xf32> -> vector<8x32xf32>
    %9 = arith.addf %5, %8 : vector<8x32xf32>
    %c0_8 = arith.constant 0 : index
    %c0_9 = arith.constant 0 : index
    %c0_10 = arith.constant 0 : index
    %10 = vector.load %arg10[%c0_8, %c0_9, %c0_10] : memref<3x8x32xf32, #tpu.memory_space<vmem>>, vector<1x8x32xf32>
    %11 = vector.shape_cast %10 : vector<1x8x32xf32> to vector<8x32xf32>
    %12 = vector.shape_cast %9 : vector<8x32xf32> to vector<1x8x32xf32>
    tpu.vector_store %arg10[%c0_8, %c0_9, %c0_10], %12 {strides = array<i32>} : memref<3x8x32xf32, #tpu.memory_space<vmem>>, vector<1x8x32xf32>,
    %c1 = arith.constant 1 : index
    %c0_11 = arith.constant 0 : index
    %c0_12 = arith.constant 0 : index
    %13 = vector.load %arg10[%c1, %c0_11, %c0_12] : memref<3x8x32xf32, #tpu.memory_space<vmem>>, vector<1x8x32xf32>
    %14 = vector.shape_cast %13 : vector<1x8x32xf32> to vector<8x32xf32>
    %c1_13 = arith.constant 1 : index
    %c0_14 = arith.constant 0 : index
    %c0_15 = arith.constant 0 : index
    %15 = vector.load %arg3[%c1_13, %c0_14, %c0_15] : memref<3x8x1024xf32, #tpu.memory_space<vmem>>, vector<1x8x1024xf32>
    %16 = vector.shape_cast %15 : vector<1x8x1024xf32> to vector<8x1024xf32>
    %cst_16 = arith.constant dense<0.000000e+00> : vector<8x32xf32>
    %17 = tpu.matmul %16, %3, %cst_16 {dimension_numbers = #tpu.dot_dimension_numbers<[1], [0], [0], [1], [0, 0, 1, 1], [], []>} : vector<8x1024xf32>, vector<1024x32xf32>, vector<8x32xf32> -> vector<8x32xf32>
    %18 = arith.addf %14, %17 : vector<8x32xf32>
    %c1_17 = arith.constant 1 : index
    %c0_18 = arith.constant 0 : index
    %c0_19 = arith.constant 0 : index
    %19 = vector.load %arg10[%c1_17, %c0_18, %c0_19] : memref<3x8x32xf32, #tpu.memory_space<vmem>>, vector<1x8x32xf32>
    %20 = vector.shape_cast %19 : vector<1x8x32xf32> to vector<8x32xf32>
    %21 = vector.shape_cast %18 : vector<8x32xf32> to vector<1x8x32xf32>
    tpu.vector_store %arg10[%c1_17, %c0_18, %c0_19], %21 {strides = array<i32>} : memref<3x8x32xf32, #tpu.memory_space<vmem>>, vector<1x8x32xf32>,
    %c2 = arith.constant 2 : index
    %c0_20 = arith.constant 0 : index
    %c0_21 = arith.constant 0 : index
    %22 = vector.load %arg10[%c2, %c0_20, %c0_21] : memref<3x8x32xf32, #tpu.memory_space<vmem>>, vector<1x8x32xf32>
    %23 = vector.shape_cast %22 : vector<1x8x32xf32> to vector<8x32xf32>
    %c2_22 = arith.constant 2 : index
    %c0_23 = arith.constant 0 : index
    %c0_24 = arith.constant 0 : index
    %24 = vector.load %arg3[%c2_22, %c0_23, %c0_24] : memref<3x8x1024xf32, #tpu.memory_space<vmem>>, vector<1x8x1024xf32>
    %25 = vector.shape_cast %24 : vector<1x8x1024xf32> to vector<8x1024xf32>
    %cst_25 = arith.constant dense<0.000000e+00> : vector<8x32xf32>
    %26 = tpu.matmul %25, %3, %cst_25 {dimension_numbers = #tpu.dot_dimension_numbers<[1], [0], [0], [1], [0, 0, 1, 1], [], []>} : vector<8x1024xf32>, vector<1024x32xf32>, vector<8x32xf32> -> vector<8x32xf32>
    %27 = arith.addf %23, %26 : vector<8x32xf32>
    %c2_26 = arith.constant 2 : index
    %c0_27 = arith.constant 0 : index
    %c0_28 = arith.constant 0 : index
    %28 = vector.load %arg10[%c2_26, %c0_27, %c0_28] : memref<3x8x32xf32, #tpu.memory_space<vmem>>, vector<1x8x32xf32>
    %29 = vector.shape_cast %28 : vector<1x8x32xf32> to vector<8x32xf32>
    %30 = vector.shape_cast %27 : vector<8x32xf32> to vector<1x8x32xf32>
    tpu.vector_store %arg10[%c2_26, %c0_27, %c0_28], %30 {strides = array<i32>} : memref<3x8x32xf32, #tpu.memory_space<vmem>>, vector<1x8x32xf32>,
    %c0_i32_29 = arith.constant 0 : i32
    %31 = arith.cmpi eq, %arg1, %c0_i32_29 : i32
    %32 = arith.extui %31 : i1 to i32
    %c0_i32_30 = arith.constant 0 : i32
    %33 = arith.cmpi ne, %32, %c0_i32_30 : i32
    scf.if %33 {
      %c0_31 = arith.constant 0 : index
      %c0_32 = arith.constant 0 : index
      %34 = vector.load %arg2[%c0_31, %c0_32] : memref<8x64xf32, #tpu.memory_space<vmem>>, vector<8x64xf32>
      %c0_33 = arith.constant 0 : index
      %c0_34 = arith.constant 0 : index
      %35 = vector.load %arg11[%c0_33, %c0_34] : memref<8x160xf32, #tpu.memory_space<vmem>>, vector<8x64xf32>
      tpu.vector_store %arg11[%c0_33, %c0_34], %34 {strides = array<i32>} : memref<8x160xf32, #tpu.memory_space<vmem>>, vector<8x64xf32>,
      %c0_35 = arith.constant 0 : index
      %c0_36 = arith.constant 0 : index
      %c0_37 = arith.constant 0 : index
      %36 = vector.load %arg10[%c0_35, %c0_36, %c0_37] : memref<3x8x32xf32, #tpu.memory_space<vmem>>, vector<1x8x32xf32>
      %37 = vector.shape_cast %36 : vector<1x8x32xf32> to vector<8x32xf32>
      %c0_38 = arith.constant 0 : index
      %c64 = arith.constant 64 : index
      %38 = vector.load %arg11[%c0_38, %c64] : memref<8x160xf32, #tpu.memory_space<vmem>>, vector<8x32xf32>
      tpu.vector_store %arg11[%c0_38, %c64], %37 {strides = array<i32>} : memref<8x160xf32, #tpu.memory_space<vmem>>, vector<8x32xf32>,
      %c1_39 = arith.constant 1 : index
      %c0_40 = arith.constant 0 : index
      %c0_41 = arith.constant 0 : index
      %39 = vector.load %arg10[%c1_39, %c0_40, %c0_41] : memref<3x8x32xf32, #tpu.memory_space<vmem>>, vector<1x8x32xf32>
      %40 = vector.shape_cast %39 : vector<1x8x32xf32> to vector<8x32xf32>
      %c0_42 = arith.constant 0 : index
      %c96 = arith.constant 96 : index
      %41 = vector.load %arg11[%c0_42, %c96] : memref<8x160xf32, #tpu.memory_space<vmem>>, vector<8x32xf32>
      tpu.vector_store %arg11[%c0_42, %c96], %40 {strides = array<i32>} : memref<8x160xf32, #tpu.memory_space<vmem>>, vector<8x32xf32>,
      %c2_43 = arith.constant 2 : index
      %c0_44 = arith.constant 0 : index
      %c0_45 = arith.constant 0 : index
      %42 = vector.load %arg10[%c2_43, %c0_44, %c0_45] : memref<3x8x32xf32, #tpu.memory_space<vmem>>, vector<1x8x32xf32>
      %43 = vector.shape_cast %42 : vector<1x8x32xf32> to vector<8x32xf32>
      %c0_46 = arith.constant 0 : index
      %c128 = arith.constant 128 : index
      %44 = vector.load %arg11[%c0_46, %c128] : memref<8x160xf32, #tpu.memory_space<vmem>>, vector<8x32xf32>
      tpu.vector_store %arg11[%c0_46, %c128], %43 {strides = array<i32>} : memref<8x160xf32, #tpu.memory_space<vmem>>, vector<8x32xf32>,
      %c0_47 = arith.constant 0 : index
      %c0_48 = arith.constant 0 : index
      %45 = vector.load %arg11[%c0_47, %c0_48] : memref<8x160xf32, #tpu.memory_space<vmem>>, vector<8x160xf32>
      %c0_49 = arith.constant 0 : index
      %c0_50 = arith.constant 0 : index
      %46 = vector.load %arg5[%c0_49, %c0_50] : memref<160x256xf32, #tpu.memory_space<vmem>>, vector<160x256xf32>
      %cst_51 = arith.constant dense<0.000000e+00> : vector<8x256xf32>
      %47 = tpu.matmul %45, %46, %cst_51 {dimension_numbers = #tpu.dot_dimension_numbers<[1], [0], [0], [1], [0, 0, 1, 1], [], []>} : vector<8x160xf32>, vector<160x256xf32>, vector<8x256xf32> -> vector<8x256xf32>
      %c0_52 = arith.constant 0 : index
      %c0_53 = arith.constant 0 : index
      %48 = vector.load %arg6[%c0_52, %c0_53] : memref<1x256xf32, #tpu.memory_space<vmem>>, vector<1x256xf32>
      %49 = vector.broadcast %48 : vector<1x256xf32> to vector<8x256xf32>
      %50 = arith.addf %47, %49 : vector<8x256xf32>
      %cst_54 = arith.constant 0.000000e+00 : f32
      %51 = vector.broadcast %cst_54 : f32 to vector<8x256xf32>
      %52 = arith.maximumf %50, %51 : vector<8x256xf32>
      %c0_55 = arith.constant 0 : index
      %c0_56 = arith.constant 0 : index
      %53 = vector.load %arg7[%c0_55, %c0_56] : memref<256x128xf32, #tpu.memory_space<vmem>>, vector<256x128xf32>
      %cst_57 = arith.constant dense<0.000000e+00> : vector<8x128xf32>
      %54 = tpu.matmul %52, %53, %cst_57 {dimension_numbers = #tpu.dot_dimension_numbers<[1], [0], [0], [1], [0, 0, 1, 1], [], []>} : vector<8x256xf32>, vector<256x128xf32>, vector<8x128xf32> -> vector<8x128xf32>
      %c0_58 = arith.constant 0 : index
      %c0_59 = arith.constant 0 : index
      %55 = vector.load %arg8[%c0_58, %c0_59] : memref<1x128xf32, #tpu.memory_space<vmem>>, vector<1x128xf32>
      %56 = vector.broadcast %55 : vector<1x128xf32> to vector<8x128xf32>
      %57 = arith.addf %54, %56 : vector<8x128xf32>
      %c0_60 = arith.constant 0 : index
      %c0_61 = arith.constant 0 : index
      %58 = vector.load %arg9[%c0_60, %c0_61] : memref<8x128xf32, #tpu.memory_space<vmem>>, vector<8x128xf32>
      tpu.vector_store %arg9[%c0_60, %c0_61], %57 {strides = array<i32>} : memref<8x128xf32, #tpu.memory_space<vmem>>, vector<8x128xf32>,
    } else {
    }
    return
  }
  func.func @transform_0(%arg0: i32, %arg1: i32) -> (i32, i32) {
    %c0_i32 = arith.constant 0 : i32
    %c0_i32_0 = arith.constant 0 : i32
    return %arg0, %c0_i32 : i32, i32
  }
  func.func @transform_1(%arg0: i32, %arg1: i32) -> (i32, i32, i32) {
    %c0_i32 = arith.constant 0 : i32
    %c0_i32_0 = arith.constant 0 : i32
    return %c0_i32, %arg0, %arg1 : i32, i32, i32
  }
  func.func @transform_2(%arg0: i32, %arg1: i32) -> (i32, i32) {
    %c0_i32 = arith.constant 0 : i32
    %c0_i32_0 = arith.constant 0 : i32
    return %arg1, %c0_i32 : i32, i32
  }
  func.func @transform_3(%arg0: i32, %arg1: i32) -> (i32, i32) {
    %c0_i32 = arith.constant 0 : i32
    %c0_i32_0 = arith.constant 0 : i32
    %c0_i32_1 = arith.constant 0 : i32
    return %c0_i32, %c0_i32_0 : i32, i32
  }
  func.func @transform_4(%arg0: i32, %arg1: i32) -> (i32, i32) {
    %c0_i32 = arith.constant 0 : i32
    %c0_i32_0 = arith.constant 0 : i32
    %c0_i32_1 = arith.constant 0 : i32
    return %c0_i32, %c0_i32_0 : i32, i32
  }
  func.func @transform_5(%arg0: i32, %arg1: i32) -> (i32, i32) {
    %c0_i32 = arith.constant 0 : i32
    %c0_i32_0 = arith.constant 0 : i32
    %c0_i32_1 = arith.constant 0 : i32
    return %c0_i32, %c0_i32_0 : i32, i32
  }
  func.func @transform_6(%arg0: i32, %arg1: i32) -> (i32, i32) {
    %c0_i32 = arith.constant 0 : i32
    %c0_i32_0 = arith.constant 0 : i32
    %c0_i32_1 = arith.constant 0 : i32
    return %c0_i32, %c0_i32_0 : i32, i32
  }
  func.func @transform_7(%arg0: i32, %arg1: i32) -> (i32, i32) {
    %c0_i32 = arith.constant 0 : i32
    %c0_i32_0 = arith.constant 0 : i32
    return %arg0, %c0_i32 : i32, i32
  }
}

module attributes {stable_mosaic.version = 11 : i64} {
  func.func @_fused_colearn_kernel(%arg0: i32, %arg1: i32, %arg2: memref<8x64xf32, #tpu.memory_space<vmem>>, %arg3: memref<3x8x1024xf32, #tpu.memory_space<vmem>>, %arg4: memref<1024x32xf32, #tpu.memory_space<vmem>>, %arg5: memref<160x256xf32, #tpu.memory_space<vmem>>, %arg6: memref<1x256xf32, #tpu.memory_space<vmem>>, %arg7: memref<256x128xf32, #tpu.memory_space<vmem>>, %arg8: memref<1x128xf32, #tpu.memory_space<vmem>>, %arg9: memref<8x128xf32, #tpu.memory_space<vmem>>, %arg10: memref<3x8x32xf32, #tpu.memory_space<vmem>>, %arg11: memref<8x160xf32, #tpu.memory_space<vmem>>) attributes {dimension_semantics = [#tpu.dimension_semantics<parallel>, #tpu.dimension_semantics<arbitrary>], iteration_bounds = array<i64: 1, 1>, scalar_prefetch = 0 : i64, scratch_operands = 2 : i64, tpu.core_type = #tpu.core_type<tc>, window_params = [{transform_indices = @transform_0, window_bounds = array<i64: 8, 64>}, {transform_indices = @transform_1, window_bounds = array<i64: 3, 8, 1024>}, {transform_indices = @transform_2, window_bounds = array<i64: 1024, 32>}, {pipeline_mode = #tpu.pipeline_mode<synchronous>, transform_indices = @transform_3, window_bounds = array<i64: 160, 256>}, {pipeline_mode = #tpu.pipeline_mode<synchronous>, transform_indices = @transform_4, window_bounds = array<i64: 1, 256>}, {pipeline_mode = #tpu.pipeline_mode<synchronous>, transform_indices = @transform_5, window_bounds = array<i64: 256, 128>}, {pipeline_mode = #tpu.pipeline_mode<synchronous>, transform_indices = @transform_6, window_bounds = array<i64: 1, 128>}, {transform_indices = @transform_7, window_bounds = array<i64: 8, 128>}]} {
    %c0_i32 = arith.constant 0 : i32
    %0 = arith.cmpi eq, %arg1, %c0_i32 : i32
    %1 = arith.extui %0 : i1 to i32
    %c0_i32_0 = arith.constant 0 : i32
    %2 = arith.cmpi ne, %1, %c0_i32_0 : i32
    scf.if %2 {
      %cst_31 = arith.constant 0.000000e+00 : f32
      %34 = vector.broadcast %cst_31 : f32 to vector<3x8x32xf32>
      %c0_32 = arith.constant 0 : index
      %c0_33 = arith.constant 0 : index
      %c0_34 = arith.constant 0 : index
      %35 = vector.load %arg10[%c0_32, %c0_33, %c0_34] : memref<3x8x32xf32, #tpu.memory_space<vmem>>, vector<3x8x32xf32>
      tpu.vector_store %arg10[%c0_32, %c0_33, %c0_34], %34 {strides = array<i32>} : memref<3x8x32xf32, #tpu.memory_space<vmem>>, vector<3x8x32xf32>,
    } else {
    }
    %c0 = arith.constant 0 : index
    %c0_1 = arith.constant 0 : index
    %3 = vector.load %arg4[%c0, %c0_1] : memref<1024x32xf32, #tpu.memory_space<vmem>>, vector<1024x32xf32>
    %c0_2 = arith.constant 0 : index
    %c0_3 = arith.constant 0 : index
    %c0_4 = arith.constant 0 : index
    %4 = vector.load %arg10[%c0_2, %c0_3, %c0_4] : memref<3x8x32xf32, #tpu.memory_space<vmem>>, vector<1x8x32xf32>
    %5 = vector.shape_cast %4 : vector<1x8x32xf32> to vector<8x32xf32>
    %c0_5 = arith.constant 0 : index
    %c0_6 = arith.constant 0 : index
    %c0_7 = arith.constant 0 : index
    %6 = vector.load %arg3[%c0_5, %c0_6, %c0_7] : memref<3x8x1024xf32, #tpu.memory_space<vmem>>, vector<1x8x1024xf32>
    %7 = vector.shape_cast %6 : vector<1x8x1024xf32> to vector<8x1024xf32>
    %cst = arith.constant dense<0.000000e+00> : vector<8x32xf32>
    %8 = tpu.matmul %7, %3, %cst {dimension_numbers = #tpu.dot_dimension_numbers<[1], [0], [0], [1], [0, 0, 1, 1], [], []>} : vector<8x1024xf32>, vector<1024x32xf32>, vector<8x32xf32> -> vector<8x32xf32>
    %9 = arith.addf %5, %8 : vector<8x32xf32>
    %c0_8 = arith.constant 0 : index
    %c0_9 = arith.constant 0 : index
    %c0_10 = arith.constant 0 : index
    %10 = vector.load %arg10[%c0_8, %c0_9, %c0_10] : memref<3x8x32xf32, #tpu.memory_space<vmem>>, vector<1x8x32xf32>
    %11 = vector.shape_cast %10 : vector<1x8x32xf32> to vector<8x32xf32>
    %12 = vector.shape_cast %9 : vector<8x32xf32> to vector<1x8x32xf32>
    tpu.vector_store %arg10[%c0_8, %c0_9, %c0_10], %12 {strides = array<i32>} : memref<3x8x32xf32, #tpu.memory_space<vmem>>, vector<1x8x32xf32>,
    %c1 = arith.constant 1 : index
    %c0_11 = arith.constant 0 : index
    %c0_12 = arith.constant 0 : index
    %13 = vector.load %arg10[%c1, %c0_11, %c0_12] : memref<3x8x32xf32, #tpu.memory_space<vmem>>, vector<1x8x32xf32>
    %14 = vector.shape_cast %13 : vector<1x8x32xf32> to vector<8x32xf32>
    %c1_13 = arith.constant 1 : index
    %c0_14 = arith.constant 0 : index
    %c0_15 = arith.constant 0 : index
    %15 = vector.load %arg3[%c1_13, %c0_14, %c0_15] : memref<3x8x1024xf32, #tpu.memory_space<vmem>>, vector<1x8x1024xf32>
    %16 = vector.shape_cast %15 : vector<1x8x1024xf32> to vector<8x1024xf32>
    %cst_16 = arith.constant dense<0.000000e+00> : vector<8x32xf32>
    %17 = tpu.matmul %16, %3, %cst_16 {dimension_numbers = #tpu.dot_dimension_numbers<[1], [0], [0], [1], [0, 0, 1, 1], [], []>} : vector<8x1024xf32>, vector<1024x32xf32>, vector<8x32xf32> -> vector<8x32xf32>
    %18 = arith.addf %14, %17 : vector<8x32xf32>
    %c1_17 = arith.constant 1 : index
    %c0_18 = arith.constant 0 : index
    %c0_19 = arith.constant 0 : index
    %19 = vector.load %arg10[%c1_17, %c0_18, %c0_19] : memref<3x8x32xf32, #tpu.memory_space<vmem>>, vector<1x8x32xf32>
    %20 = vector.shape_cast %19 : vector<1x8x32xf32> to vector<8x32xf32>
    %21 = vector.shape_cast %18 : vector<8x32xf32> to vector<1x8x32xf32>
    tpu.vector_store %arg10[%c1_17, %c0_18, %c0_19], %21 {strides = array<i32>} : memref<3x8x32xf32, #tpu.memory_space<vmem>>, vector<1x8x32xf32>,
    %c2 = arith.constant 2 : index
    %c0_20 = arith.constant 0 : index
    %c0_21 = arith.constant 0 : index
    %22 = vector.load %arg10[%c2, %c0_20, %c0_21] : memref<3x8x32xf32, #tpu.memory_space<vmem>>, vector<1x8x32xf32>
    %23 = vector.shape_cast %22 : vector<1x8x32xf32> to vector<8x32xf32>
    %c2_22 = arith.constant 2 : index
    %c0_23 = arith.constant 0 : index
    %c0_24 = arith.constant 0 : index
    %24 = vector.load %arg3[%c2_22, %c0_23, %c0_24] : memref<3x8x1024xf32, #tpu.memory_space<vmem>>, vector<1x8x1024xf32>
    %25 = vector.shape_cast %24 : vector<1x8x1024xf32> to vector<8x1024xf32>
    %cst_25 = arith.constant dense<0.000000e+00> : vector<8x32xf32>
    %26 = tpu.matmul %25, %3, %cst_25 {dimension_numbers = #tpu.dot_dimension_numbers<[1], [0], [0], [1], [0, 0, 1, 1], [], []>} : vector<8x1024xf32>, vector<1024x32xf32>, vector<8x32xf32> -> vector<8x32xf32>
    %27 = arith.addf %23, %26 : vector<8x32xf32>
    %c2_26 = arith.constant 2 : index
    %c0_27 = arith.constant 0 : index
    %c0_28 = arith.constant 0 : index
    %28 = vector.load %arg10[%c2_26, %c0_27, %c0_28] : memref<3x8x32xf32, #tpu.memory_space<vmem>>, vector<1x8x32xf32>
    %29 = vector.shape_cast %28 : vector<1x8x32xf32> to vector<8x32xf32>
    %30 = vector.shape_cast %27 : vector<8x32xf32> to vector<1x8x32xf32>
    tpu.vector_store %arg10[%c2_26, %c0_27, %c0_28], %30 {strides = array<i32>} : memref<3x8x32xf32, #tpu.memory_space<vmem>>, vector<1x8x32xf32>,
    %c0_i32_29 = arith.constant 0 : i32
    %31 = arith.cmpi eq, %arg1, %c0_i32_29 : i32
    %32 = arith.extui %31 : i1 to i32
    %c0_i32_30 = arith.constant 0 : i32
    %33 = arith.cmpi ne, %32, %c0_i32_30 : i32
    scf.if %33 {
      %c0_31 = arith.constant 0 : index
      %c0_32 = arith.constant 0 : index
      %34 = vector.load %arg2[%c0_31, %c0_32] : memref<8x64xf32, #tpu.memory_space<vmem>>, vector<8x64xf32>
      %c0_33 = arith.constant 0 : index
      %c0_34 = arith.constant 0 : index
      %35 = vector.load %arg11[%c0_33, %c0_34] : memref<8x160xf32, #tpu.memory_space<vmem>>, vector<8x64xf32>
      tpu.vector_store %arg11[%c0_33, %c0_34], %34 {strides = array<i32>} : memref<8x160xf32, #tpu.memory_space<vmem>>, vector<8x64xf32>,
      %c0_35 = arith.constant 0 : index
      %c0_36 = arith.constant 0 : index
      %c0_37 = arith.constant 0 : index
      %36 = vector.load %arg10[%c0_35, %c0_36, %c0_37] : memref<3x8x32xf32, #tpu.memory_space<vmem>>, vector<1x8x32xf32>
      %37 = vector.shape_cast %36 : vector<1x8x32xf32> to vector<8x32xf32>
      %c0_38 = arith.constant 0 : index
      %c64 = arith.constant 64 : index
      %38 = vector.load %arg11[%c0_38, %c64] : memref<8x160xf32, #tpu.memory_space<vmem>>, vector<8x32xf32>
      tpu.vector_store %arg11[%c0_38, %c64], %37 {strides = array<i32>} : memref<8x160xf32, #tpu.memory_space<vmem>>, vector<8x32xf32>,
      %c1_39 = arith.constant 1 : index
      %c0_40 = arith.constant 0 : index
      %c0_41 = arith.constant 0 : index
      %39 = vector.load %arg10[%c1_39, %c0_40, %c0_41] : memref<3x8x32xf32, #tpu.memory_space<vmem>>, vector<1x8x32xf32>
      %40 = vector.shape_cast %39 : vector<1x8x32xf32> to vector<8x32xf32>
      %c0_42 = arith.constant 0 : index
      %c96 = arith.constant 96 : index
      %41 = vector.load %arg11[%c0_42, %c96] : memref<8x160xf32, #tpu.memory_space<vmem>>, vector<8x32xf32>
      tpu.vector_store %arg11[%c0_42, %c96], %40 {strides = array<i32>} : memref<8x160xf32, #tpu.memory_space<vmem>>, vector<8x32xf32>,
      %c2_43 = arith.constant 2 : index
      %c0_44 = arith.constant 0 : index
      %c0_45 = arith.constant 0 : index
      %42 = vector.load %arg10[%c2_43, %c0_44, %c0_45] : memref<3x8x32xf32, #tpu.memory_space<vmem>>, vector<1x8x32xf32>
      %43 = vector.shape_cast %42 : vector<1x8x32xf32> to vector<8x32xf32>
      %c0_46 = arith.constant 0 : index
      %c128 = arith.constant 128 : index
      %44 = vector.load %arg11[%c0_46, %c128] : memref<8x160xf32, #tpu.memory_space<vmem>>, vector<8x32xf32>
      tpu.vector_store %arg11[%c0_46, %c128], %43 {strides = array<i32>} : memref<8x160xf32, #tpu.memory_space<vmem>>, vector<8x32xf32>,
      %c0_47 = arith.constant 0 : index
      %c0_48 = arith.constant 0 : index
      %45 = vector.load %arg11[%c0_47, %c0_48] : memref<8x160xf32, #tpu.memory_space<vmem>>, vector<8x160xf32>
      %c0_49 = arith.constant 0 : index
      %c0_50 = arith.constant 0 : index
      %46 = vector.load %arg5[%c0_49, %c0_50] : memref<160x256xf32, #tpu.memory_space<vmem>>, vector<160x256xf32>
      %cst_51 = arith.constant dense<0.000000e+00> : vector<8x256xf32>
      %47 = tpu.matmul %45, %46, %cst_51 {dimension_numbers = #tpu.dot_dimension_numbers<[1], [0], [0], [1], [0, 0, 1, 1], [], []>} : vector<8x160xf32>, vector<160x256xf32>, vector<8x256xf32> -> vector<8x256xf32>
      %c0_52 = arith.constant 0 : index
      %c0_53 = arith.constant 0 : index
      %48 = vector.load %arg6[%c0_52, %c0_53] : memref<1x256xf32, #tpu.memory_space<vmem>>, vector<1x256xf32>
      %49 = vector.broadcast %48 : vector<1x256xf32> to vector<8x256xf32>
      %50 = arith.addf %47, %49 : vector<8x256xf32>
      %cst_54 = arith.constant 0.000000e+00 : f32
      %51 = vector.broadcast %cst_54 : f32 to vector<8x256xf32>
      %52 = arith.maximumf %50, %51 : vector<8x256xf32>
      %c0_55 = arith.constant 0 : index
      %c0_56 = arith.constant 0 : index
      %53 = vector.load %arg7[%c0_55, %c0_56] : memref<256x128xf32, #tpu.memory_space<vmem>>, vector<256x128xf32>
      %cst_57 = arith.constant dense<0.000000e+00> : vector<8x128xf32>
      %54 = tpu.matmul %52, %53, %cst_57 {dimension_numbers = #tpu.dot_dimension_numbers<[1], [0], [0], [1], [0, 0, 1, 1], [], []>} : vector<8x256xf32>, vector<256x128xf32>, vector<8x128xf32> -> vector<8x128xf32>
      %c0_58 = arith.constant 0 : index
      %c0_59 = arith.constant 0 : index
      %55 = vector.load %arg8[%c0_58, %c0_59] : memref<1x128xf32, #tpu.memory_space<vmem>>, vector<1x128xf32>
      %56 = vector.broadcast %55 : vector<1x128xf32> to vector<8x128xf32>
      %57 = arith.addf %54, %56 : vector<8x128xf32>
      %c0_60 = arith.constant 0 : index
      %c0_61 = arith.constant 0 : index
      %58 = vector.load %arg9[%c0_60, %c0_61] : memref<8x128xf32, #tpu.memory_space<vmem>>, vector<8x128xf32>
      tpu.vector_store %arg9[%c0_60, %c0_61], %57 {strides = array<i32>} : memref<8x128xf32, #tpu.memory_space<vmem>>, vector<8x128xf32>,
    } else {
    }
    return
  }
  func.func @transform_0(%arg0: i32, %arg1: i32) -> (i32, i32) {
    %c0_i32 = arith.constant 0 : i32
    %c0_i32_0 = arith.constant 0 : i32
    return %arg0, %c0_i32 : i32, i32
  }
  func.func @transform_1(%arg0: i32, %arg1: i32) -> (i32, i32, i32) {
    %c0_i32 = arith.constant 0 : i32
    %c0_i32_0 = arith.constant 0 : i32
    return %c0_i32, %arg0, %arg1 : i32, i32, i32
  }
  func.func @transform_2(%arg0: i32, %arg1: i32) -> (i32, i32) {
    %c0_i32 = arith.constant 0 : i32
    %c0_i32_0 = arith.constant 0 : i32
    return %arg1, %c0_i32 : i32, i32
  }
  func.func @transform_3(%arg0: i32, %arg1: i32) -> (i32, i32) {
    %c0_i32 = arith.constant 0 : i32
    %c0_i32_0 = arith.constant 0 : i32
    %c0_i32_1 = arith.constant 0 : i32
    return %c0_i32, %c0_i32_0 : i32, i32
  }
  func.func @transform_4(%arg0: i32, %arg1: i32) -> (i32, i32) {
    %c0_i32 = arith.constant 0 : i32
    %c0_i32_0 = arith.constant 0 : i32
    %c0_i32_1 = arith.constant 0 : i32
    return %c0_i32, %c0_i32_0 : i32, i32
  }
  func.func @transform_5(%arg0: i32, %arg1: i32) -> (i32, i32) {
    %c0_i32 = arith.constant 0 : i32
    %c0_i32_0 = arith.constant 0 : i32
    %c0_i32_1 = arith.constant 0 : i32
    return %c0_i32, %c0_i32_0 : i32, i32
  }
  func.func @transform_6(%arg0: i32, %arg1: i32) -> (i32, i32) {
    %c0_i32 = arith.constant 0 : i32
    %c0_i32_0 = arith.constant 0 : i32
    %c0_i32_1 = arith.constant 0 : i32
    return %c0_i32, %c0_i32_0 : i32, i32
  }
  func.func @transform_7(%arg0: i32, %arg1: i32) -> (i32, i32) {
    %c0_i32 = arith.constant 0 : i32
    %c0_i32_0 = arith.constant 0 : i32
    return %arg0, %c0_i32 : i32, i32
  }
}

</mosaic_0001>

<llo_original>
// kernel: clipikea_colearn_forward.1
$region0: #{clipikea_colearn_forward.1}
  #allocation0 [shape = 'u32[]', space=smem, size = 0x4, offset = 0x4, fixed_abs, tag = 'smem constant byte address 0x4 - core index']
  #allocation1 [shape = 'u32[72,128]{1,0:T(1,128)}', space=vmem, size = 0x9000, scoped, tag = 'internal scratch']
  #allocation2 [shape = 'f32[3,8,32]{2,1,0:T(8,128)}', space=vmem, size = 0x3000, scoped, tag = 'scratch operand']
  #allocation3 [shape = 'f32[8,160]{1,0:T(8,128)}', space=vmem, size = 0x2000, scoped, tag = 'scratch operand']
  %s0 = inlined_call_operand.vmem [shape: f32[8,64], index: 0, kind: input, shape index: {}]
  %s1 = inlined_call_operand.vmem [shape: f32[3,8,1024], index: 1, kind: input, shape index: {}]
  %s2 = inlined_call_operand.vmem [shape: f32[1024,32], index: 2, kind: input, shape index: {}]
  %s3 = inlined_call_operand.vmem [shape: f32[160,256], index: 3, kind: input, shape index: {}]
  %s4 = inlined_call_operand.vmem [shape: f32[1,256], index: 4, kind: input, shape index: {}]
  %s5 = inlined_call_operand.vmem [shape: f32[256,128], index: 5, kind: input, shape index: {}]
  %s6 = inlined_call_operand.vmem [shape: f32[1,128], index: 6, kind: input, shape index: {}]
  %s7 = inlined_call_operand.vmem [shape: f32[8,128], index: 7, kind: output, shape index: {}]
  %s8 = sld [smem:[#allocation0]]
  $region46: #{clipikea_colearn_forward.1} parent=0
    _
  %s10 = ssub.s32 1, %s8
  %s11 = scalar_select 0, %s10, %s8
  // Predicated region
  $region2: #{clipikea_colearn_forward.1} parent=0 // pred_check
    _
  $region3: #{clipikea_colearn_forward.1} parent=0 // pred_check_branch
    %13 = sbr.rel (0) target = $region5
  $region4: #{clipikea_colearn_forward.1} parent=0 // pred_region
    _
  $region5: #{clipikea_colearn_forward.1} parent=0 // pred_fallthru
    _
  // Predicated region
  $region6: #{clipikea_colearn_forward.1} parent=0 // pred_check
    _
  $region7: #{clipikea_colearn_forward.1} parent=0 // pred_check_branch
    %15 = sbr.rel (0) target = $region9
  $region8: #{clipikea_colearn_forward.1} parent=0 // pred_region
    _
  $region9: #{clipikea_colearn_forward.1} parent=0 // pred_fallthru
    _
  // Predicated region
  $region10: #{clipikea_colearn_forward.1} parent=0 // pred_check
    _
  $region11: #{clipikea_colearn_forward.1} parent=0 // pred_check_branch
    %17 = sbr.rel (0) target = $region13
  $region12: #{clipikea_colearn_forward.1} parent=0 // pred_region
    _
  $region13: #{clipikea_colearn_forward.1} parent=0 // pred_fallthru
    _
  // Predicated region
  $region14: #{clipikea_colearn_forward.1} parent=0 // pred_check
    _
  $region15: #{clipikea_colearn_forward.1} parent=0 // pred_check_branch
    %19 = sbr.rel (0) target = $region17
  $region16: #{clipikea_colearn_forward.1} parent=0 // pred_region
    _
  $region17: #{clipikea_colearn_forward.1} parent=0 // pred_fallthru
    _
  // Predicated region
  $region18: #{clipikea_colearn_forward.1} parent=0 // pred_check
    _
  $region19: #{clipikea_colearn_forward.1} parent=0 // pred_check_branch
    %21 = sbr.rel (0) target = $region21
  $region20: #{clipikea_colearn_forward.1} parent=0 // pred_region
    _
  $region21: #{clipikea_colearn_forward.1} parent=0 // pred_fallthru
    _
  // Predicated region
  $region22: #{clipikea_colearn_forward.1} parent=0 // pred_check
    _
  $region23: #{clipikea_colearn_forward.1} parent=0 // pred_check_branch
    %23 = sbr.rel (0) target = $region25
  $region24: #{clipikea_colearn_forward.1} parent=0 // pred_region
    _
  $region25: #{clipikea_colearn_forward.1} parent=0 // pred_fallthru
    _
  // Predicated region
  $region26: #{clipikea_colearn_forward.1} parent=0 // pred_check
    _
  $region27: #{clipikea_colearn_forward.1} parent=0 // pred_check_branch
    %25 = sbr.rel (0) target = $region29
  $region28: #{clipikea_colearn_forward.1} parent=0 // pred_region
    _
  $region29: #{clipikea_colearn_forward.1} parent=0 // pred_fallthru
    _
  %p26 = scmp.eq.s32.totalorder 0, 0
  // Predicated region
  $region30: #{clipikea_colearn_forward.1} parent=0 // pred_check
    %p27 = pneg %p26
  $region31: #{clipikea_colearn_forward.1} parent=0 // pred_check_branch
    %29 = sbr.rel (%p27) target = $region33
  $region32: #{clipikea_colearn_forward.1} parent=0 // pred_region
    %vm30 = vcmask 261120
    %31 = vst.msk [vmem:[#allocation2] sm:$0xff] %vm30, 0.0
    %32 = vst.msk [vmem:[#allocation2 + $0x8] sm:$0xff] %vm30, 0.0
    %33 = vst.msk [vmem:[#allocation2 + $0x10] sm:$0xff] %vm30, 0.0
  $region33: #{clipikea_colearn_forward.1} parent=0 // pred_fallthru
    _
  %v34 = vld [vmem:[%s2] sm:$0xff]
  %v35 = vld [vmem:[%s2 + $0x8] sm:$0xff]
  %v36 = vld [vmem:[%s2 + $0x10] sm:$0xff]
  %v37 = vld [vmem:[%s2 + $0x18] sm:$0xff]
  %v38 = vld [vmem:[%s2 + $0x20] sm:$0xff]
  %v39 = vld [vmem:[%s2 + $0x28] sm:$0xff]
  %v40 = vld [vmem:[%s2 + $0x30] sm:$0xff]
  %v41 = vld [vmem:[%s2 + $0x38] sm:$0xff]
  %v42 = vld [vmem:[%s2 + $0x40] sm:$0xff]
  %v43 = vld [vmem:[%s2 + $0x48] sm:$0xff]
  %v44 = vld [vmem:[%s2 + $0x50] sm:$0xff]
  %v45 = vld [vmem:[%s2 + $0x58] sm:$0xff]
  %v46 = vld [vmem:[%s2 + $0x60] sm:$0xff]
  %v47 = vld [vmem:[%s2 + $0x68] sm:$0xff]
  %v48 = vld [vmem:[%s2 + $0x70] sm:$0xff]
  %v49 = vld [vmem:[%s2 + $0x78] sm:$0xff]
  %v50 = vld [vmem:[%s2 + $0x80] sm:$0xff]
  %v51 = vld [vmem:[%s2 + $0x88] sm:$0xff]
  %v52 = vld [vmem:[%s2 + $0x90] sm:$0xff]
  %v53 = vld [vmem:[%s2 + $0x98] sm:$0xff]
  %v54 = vld [vmem:[%s2 + $0xa0] sm:$0xff]
  %v55 = vld [vmem:[%s2 + $0xa8] sm:$0xff]
  %v56 = vld [vmem:[%s2 + $0xb0] sm:$0xff]
  %v57 = vld [vmem:[%s2 + $0xb8] sm:$0xff]
  %v58 = vld [vmem:[%s2 + $0xc0] sm:$0xff]
  %v59 = vld [vmem:[%s2 + $0xc8] sm:$0xff]
  %v60 = vld [vmem:[%s2 + $0xd0] sm:$0xff]
  %v61 = vld [vmem:[%s2 + $0xd8] sm:$0xff]
  %v62 = vld [vmem:[%s2 + $0xe0] sm:$0xff]
  %v63 = vld [vmem:[%s2 + $0xe8] sm:$0xff]
  %v64 = vld [vmem:[%s2 + $0xf0] sm:$0xff]
  %v65 = vld [vmem:[%s2 + $0xf8] sm:$0xff]
  %v66 = vld [vmem:[%s2 + $0x100] sm:$0xff]
  %v67 = vld [vmem:[%s2 + $0x108] sm:$0xff]
  %v68 = vld [vmem:[%s2 + $0x110] sm:$0xff]
  %v69 = vld [vmem:[%s2 + $0x118] sm:$0xff]
  %v70 = vld [vmem:[%s2 + $0x120] sm:$0xff]
  %v71 = vld [vmem:[%s2 + $0x128] sm:$0xff]
  %v72 = vld [vmem:[%s2 + $0x130] sm:$0xff]
  %v73 = vld [vmem:[%s2 + $0x138] sm:$0xff]
  %v74 = vld [vmem:[%s2 + $0x140] sm:$0xff]
  %v75 = vld [vmem:[%s2 + $0x148] sm:$0xff]
  %v76 = vld [vmem:[%s2 + $0x150] sm:$0xff]
  %v77 = vld [vmem:[%s2 + $0x158] sm:$0xff]
  %v78 = vld [vmem:[%s2 + $0x160] sm:$0xff]
  %v79 = vld [vmem:[%s2 + $0x168] sm:$0xff]
  %v80 = vld [vmem:[%s2 + $0x170] sm:$0xff]
  %v81 = vld [vmem:[%s2 + $0x178] sm:$0xff]
  %v82 = vld [vmem:[%s2 + $0x180] sm:$0xff]
  %v83 = vld [vmem:[%s2 + $0x188] sm:$0xff]
  %v84 = vld [vmem:[%s2 + $0x190] sm:$0xff]
  %v85 = vld [vmem:[%s2 + $0x198] sm:$0xff]
  %v86 = vld [vmem:[%s2 + $0x1a0] sm:$0xff]
  %v87 = vld [vmem:[%s2 + $0x1a8] sm:$0xff]
  %v88 = vld [vmem:[%s2 + $0x1b0] sm:$0xff]
  %v89 = vld [vmem:[%s2 + $0x1b8] sm:$0xff]
  %v90 = vld [vmem:[%s2 + $0x1c0] sm:$0xff]
  %v91 = vld [vmem:[%s2 + $0x1c8] sm:$0xff]
  %v92 = vld [vmem:[%s2 + $0x1d0] sm:$0xff]
  %v93 = vld [vmem:[%s2 + $0x1d8] sm:$0xff]
  %v94 = vld [vmem:[%s2 + $0x1e0] sm:$0xff]
  %v95 = vld [vmem:[%s2 + $0x1e8] sm:$0xff]
  %v96 = vld [vmem:[%s2 + $0x1f0] sm:$0xff]
  %v97 = vld [vmem:[%s2 + $0x1f8] sm:$0xff]
  %v98 = vld [vmem:[%s2 + $0x200] sm:$0xff]
  %v99 = vld [vmem:[%s2 + $0x208] sm:$0xff]
  %v100 = vld [vmem:[%s2 + $0x210] sm:$0xff]
  %v101 = vld [vmem:[%s2 + $0x218] sm:$0xff]
  %v102 = vld [vmem:[%s2 + $0x220] sm:$0xff]
  %v103 = vld [vmem:[%s2 + $0x228] sm:$0xff]
  %v104 = vld [vmem:[%s2 + $0x230] sm:$0xff]
  %v105 = vld [vmem:[%s2 + $0x238] sm:$0xff]
  %v106 = vld [vmem:[%s2 + $0x240] sm:$0xff]
  %v107 = vld [vmem:[%s2 + $0x248] sm:$0xff]
  %v108 = vld [vmem:[%s2 + $0x250] sm:$0xff]
  %v109 = vld [vmem:[%s2 + $0x258] sm:$0xff]
  %v110 = vld [vmem:[%s2 + $0x260] sm:$0xff]
  %v111 = vld [vmem:[%s2 + $0x268] sm:$0xff]
  %v112 = vld [vmem:[%s2 + $0x270] sm:$0xff]
  %v113 = vld [vmem:[%s2 + $0x278] sm:$0xff]
  %v114 = vld [vmem:[%s2 + $0x280] sm:$0xff]
  %v115 = vld [vmem:[%s2 + $0x288] sm:$0xff]
  %v116 = vld [vmem:[%s2 + $0x290] sm:$0xff]
  %v117 = vld [vmem:[%s2 + $0x298] sm:$0xff]
  %v118 = vld [vmem:[%s2 + $0x2a0] sm:$0xff]
  %v119 = vld [vmem:[%s2 + $0x2a8] sm:$0xff]
  %v120 = vld [vmem:[%s2 + $0x2b0] sm:$0xff]
  %v121 = vld [vmem:[%s2 + $0x2b8] sm:$0xff]
  %v122 = vld [vmem:[%s2 + $0x2c0] sm:$0xff]
  %v123 = vld [vmem:[%s2 + $0x2c8] sm:$0xff]
  %v124 = vld [vmem:[%s2 + $0x2d0] sm:$0xff]
  %v125 = vld [vmem:[%s2 + $0x2d8] sm:$0xff]
  %v126 = vld [vmem:[%s2 + $0x2e0] sm:$0xff]
  %v127 = vld [vmem:[%s2 + $0x2e8] sm:$0xff]
  %v128 = vld [vmem:[%s2 + $0x2f0] sm:$0xff]
  %v129 = vld [vmem:[%s2 + $0x2f8] sm:$0xff]
  %v130 = vld [vmem:[%s2 + $0x300] sm:$0xff]
  %v131 = vld [vmem:[%s2 + $0x308] sm:$0xff]
  %v132 = vld [vmem:[%s2 + $0x310] sm:$0xff]
  %v133 = vld [vmem:[%s2 + $0x318] sm:$0xff]
  %v134 = vld [vmem:[%s2 + $0x320] sm:$0xff]
  %v135 = vld [vmem:[%s2 + $0x328] sm:$0xff]
  %v136 = vld [vmem:[%s2 + $0x330] sm:$0xff]
  %v137 = vld [vmem:[%s2 + $0x338] sm:$0xff]
  %v138 = vld [vmem:[%s2 + $0x340] sm:$0xff]
  %v139 = vld [vmem:[%s2 + $0x348] sm:$0xff]
  %v140 = vld [vmem:[%s2 + $0x350] sm:$0xff]
  %v141 = vld [vmem:[%s2 + $0x358] sm:$0xff]
  %v142 = vld [vmem:[%s2 + $0x360] sm:$0xff]
  %v143 = vld [vmem:[%s2 + $0x368] sm:$0xff]
  %v144 = vld [vmem:[%s2 + $0x370] sm:$0xff]
  %v145 = vld [vmem:[%s2 + $0x378] sm:$0xff]
  %v146 = vld [vmem:[%s2 + $0x380] sm:$0xff]
  %v147 = vld [vmem:[%s2 + $0x388] sm:$0xff]
  %v148 = vld [vmem:[%s2 + $0x390] sm:$0xff]
  %v149 = vld [vmem:[%s2 + $0x398] sm:$0xff]
  %v150 = vld [vmem:[%s2 + $0x3a0] sm:$0xff]
  %v151 = vld [vmem:[%s2 + $0x3a8] sm:$0xff]
  %v152 = vld [vmem:[%s2 + $0x3b0] sm:$0xff]
  %v153 = vld [vmem:[%s2 + $0x3b8] sm:$0xff]
  %v154 = vld [vmem:[%s2 + $0x3c0] sm:$0xff]
  %v155 = vld [vmem:[%s2 + $0x3c8] sm:$0xff]
  %v156 = vld [vmem:[%s2 + $0x3d0] sm:$0xff]
  %v157 = vld [vmem:[%s2 + $0x3d8] sm:$0xff]
  %v158 = vld [vmem:[%s2 + $0x3e0] sm:$0xff]
  %v159 = vld [vmem:[%s2 + $0x3e8] sm:$0xff]
  %v160 = vld [vmem:[%s2 + $0x3f0] sm:$0xff]
  %v161 = vld [vmem:[%s2 + $0x3f8] sm:$0xff]
  %v162 = vld [vmem:[#allocation2] sm:$0xff]
  %v163 = vld [vmem:[%s1] sm:$0xff]
  %v164 = vld [vmem:[%s1 + $0x8] sm:$0xff]
  %v165 = vld [vmem:[%s1 + $0x10] sm:$0xff]
  %v166 = vld [vmem:[%s1 + $0x18] sm:$0xff]
  %v167 = vld [vmem:[%s1 + $0x20] sm:$0xff]
  %v168 = vld [vmem:[%s1 + $0x28] sm:$0xff]
  %v169 = vld [vmem:[%s1 + $0x30] sm:$0xff]
  %v170 = vld [vmem:[%s1 + $0x38] sm:$0xff]
  %171 = vmatpush.msra.mxu0 %v49
  %172 = vmatpush.msra.mxu0 %v48
  %173 = vmatpush.msra.mxu0 %v47
  %174 = vmatpush.msra.mxu0 %v46
  %175 = vmatpush.msra.mxu0 %v45
  %176 = vmatpush.msra.mxu0 %v44
  %177 = vmatpush.msra.mxu0 %v43
  %178 = vmatpush.msra.mxu0 %v42
  %179 = vmatpush.msra.mxu0 %v41
  %180 = vmatpush.msra.mxu0 %v40
  %181 = vmatpush.msra.mxu0 %v39
  %182 = vmatpush.msra.mxu0 %v38
  %183 = vmatpush.msra.mxu0 %v37
  %184 = vmatpush.msra.mxu0 %v36
  %185 = vmatpush.msra.mxu0 %v35
  %186 = vmatpush.msra.mxu0 %v34
  %187 = vmatmul.f32.gmra.mxu0 %v163
  %v188 = vpop.f32.mrf.mxu0
  %v189 = vadd.f32 0.0, %v188
  %190 = vdwg.mxu0
  %191 = vmatpush.msra.mxu0 %v65
  %192 = vmatpush.msra.mxu0 %v64
  %193 = vmatpush.msra.mxu0 %v63
  %194 = vmatpush.msra.mxu0 %v62
  %195 = vmatpush.msra.mxu0 %v61
  %196 = vmatpush.msra.mxu0 %v60
  %197 = vmatpush.msra.mxu0 %v59
  %198 = vmatpush.msra.mxu0 %v58
  %199 = vmatpush.msra.mxu0 %v57
  %200 = vmatpush.msra.mxu0 %v56
  %201 = vmatpush.msra.mxu0 %v55
  %202 = vmatpush.msra.mxu0 %v54
  %203 = vmatpush.msra.mxu0 %v53
  %204 = vmatpush.msra.mxu0 %v52
  %205 = vmatpush.msra.mxu0 %v51
  %206 = vmatpush.msra.mxu0 %v50
  %207 = vmatmul.f32.gmra.mxu0 %v164
  %v208 = vpop.f32.mrf.mxu0
  %v209 = vadd.f32 %v189, %v208
  %210 = vdwg.mxu0
  %211 = vmatpush.msra.mxu0 %v81
  %212 = vmatpush.msra.mxu0 %v80
  %213 = vmatpush.msra.mxu0 %v79
  %214 = vmatpush.msra.mxu0 %v78
  %215 = vmatpush.msra.mxu0 %v77
  %216 = vmatpush.msra.mxu0 %v76
  %217 = vmatpush.msra.mxu0 %v75
  %218 = vmatpush.msra.mxu0 %v74
  %219 = vmatpush.msra.mxu0 %v73
  %220 = vmatpush.msra.mxu0 %v72
  %221 = vmatpush.msra.mxu0 %v71
  %222 = vmatpush.msra.mxu0 %v70
  %223 = vmatpush.msra.mxu0 %v69
  %224 = vmatpush.msra.mxu0 %v68
  %225 = vmatpush.msra.mxu0 %v67
  %226 = vmatpush.msra.mxu0 %v66
  %227 = vmatmul.f32.gmra.mxu0 %v165
  %v228 = vpop.f32.mrf.mxu0
  %v229 = vadd.f32 %v209, %v228
  %230 = vdwg.mxu0
  %231 = vmatpush.msra.mxu0 %v97
  %232 = vmatpush.msra.mxu0 %v96
  %233 = vmatpush.msra.mxu0 %v95
  %234 = vmatpush.msra.mxu0 %v94
  %235 = vmatpush.msra.mxu0 %v93
  %236 = vmatpush.msra.mxu0 %v92
  %237 = vmatpush.msra.mxu0 %v91
  %238 = vmatpush.msra.mxu0 %v90
  %239 = vmatpush.msra.mxu0 %v89
  %240 = vmatpush.msra.mxu0 %v88
  %241 = vmatpush.msra.mxu0 %v87
  %242 = vmatpush.msra.mxu0 %v86
  %243 = vmatpush.msra.mxu0 %v85
  %244 = vmatpush.msra.mxu0 %v84
  %245 = vmatpush.msra.mxu0 %v83
  %246 = vmatpush.msra.mxu0 %v82
  %247 = vmatmul.f32.gmra.mxu0 %v166
  %v248 = vpop.f32.mrf.mxu0
  %v249 = vadd.f32 %v229, %v248
  %250 = vdwg.mxu0
  %251 = vmatpush.msra.mxu0 %v113
  %252 = vmatpush.msra.mxu0 %v112
  %253 = vmatpush.msra.mxu0 %v111
  %254 = vmatpush.msra.mxu0 %v110
  %255 = vmatpush.msra.mxu0 %v109
  %256 = vmatpush.msra.mxu0 %v108
  %257 = vmatpush.msra.mxu0 %v107
  %258 = vmatpush.msra.mxu0 %v106
  %259 = vmatpush.msra.mxu0 %v105
  %260 = vmatpush.msra.mxu0 %v104
  %261 = vmatpush.msra.mxu0 %v103
  %262 = vmatpush.msra.mxu0 %v102
  %263 = vmatpush.msra.mxu0 %v101
  %264 = vmatpush.msra.mxu0 %v100
  %265 = vmatpush.msra.mxu0 %v99
  %266 = vmatpush.msra.mxu0 %v98
  %267 = vmatmul.f32.gmra.mxu0 %v167
  %v268 = vpop.f32.mrf.mxu0
  %v269 = vadd.f32 %v249, %v268
  %270 = vdwg.mxu0
  %271 = vmatpush.msra.mxu0 %v129
  %272 = vmatpush.msra.mxu0 %v128
  %273 = vmatpush.msra.mxu0 %v127
  %274 = vmatpush.msra.mxu0 %v126
  %275 = vmatpush.msra.mxu0 %v125
  %276 = vmatpush.msra.mxu0 %v124
  %277 = vmatpush.msra.mxu0 %v123
  %278 = vmatpush.msra.mxu0 %v122
  %279 = vmatpush.msra.mxu0 %v121
  %280 = vmatpush.msra.mxu0 %v120
  %281 = vmatpush.msra.mxu0 %v119
  %282 = vmatpush.msra.mxu0 %v118
  %283 = vmatpush.msra.mxu0 %v117
  %284 = vmatpush.msra.mxu0 %v116
  %285 = vmatpush.msra.mxu0 %v115
  %286 = vmatpush.msra.mxu0 %v114
  %287 = vmatmul.f32.gmra.mxu0 %v168
  %v288 = vpop.f32.mrf.mxu0
  %v289 = vadd.f32 %v269, %v288
  %290 = vdwg.mxu0
  %291 = vmatpush.msra.mxu0 %v145
  %292 = vmatpush.msra.mxu0 %v144
  %293 = vmatpush.msra.mxu0 %v143
  %294 = vmatpush.msra.mxu0 %v142
  %295 = vmatpush.msra.mxu0 %v141
  %296 = vmatpush.msra.mxu0 %v140
  %297 = vmatpush.msra.mxu0 %v139
  %298 = vmatpush.msra.mxu0 %v138
  %299 = vmatpush.msra.mxu0 %v137
  %300 = vmatpush.msra.mxu0 %v136
  %301 = vmatpush.msra.mxu0 %v135
  %302 = vmatpush.msra.mxu0 %v134
  %303 = vmatpush.msra.mxu0 %v133
  %304 = vmatpush.msra.mxu0 %v132
  %305 = vmatpush.msra.mxu0 %v131
  %306 = vmatpush.msra.mxu0 %v130
  %307 = vmatmul.f32.gmra.mxu0 %v169
  %v308 = vpop.f32.mrf.mxu0
  %v309 = vadd.f32 %v289, %v308
  %310 = vdwg.mxu0
  %311 = vmatpush.msra.mxu0 %v161
  %312 = vmatpush.msra.mxu0 %v160
  %313 = vmatpush.msra.mxu0 %v159
  %314 = vmatpush.msra.mxu0 %v158
  %315 = vmatpush.msra.mxu0 %v157
  %316 = vmatpush.msra.mxu0 %v156
  %317 = vmatpush.msra.mxu0 %v155
  %318 = vmatpush.msra.mxu0 %v154
  %319 = vmatpush.msra.mxu0 %v153
  %320 = vmatpush.msra.mxu0 %v152
  %321 = vmatpush.msra.mxu0 %v151
  %322 = vmatpush.msra.mxu0 %v150
  %323 = vmatpush.msra.mxu0 %v149
  %324 = vmatpush.msra.mxu0 %v148
  %325 = vmatpush.msra.mxu0 %v147
  %326 = vmatpush.msra.mxu0 %v146
  %327 = vmatmul.f32.gmra.mxu0 %v170
  %v328 = vpop.f32.mrf.mxu0
  %v329 = vadd.f32 %v309, %v328
  %330 = vdwg.mxu0
  %v331 = vadd.f32 %v162, %v329
  %vm332 = vcmask 261120
  %333 = vst.msk [vmem:[#allocation2] sm:$0xff] %vm332, %v331
  %s334 = scalar_lea.vmem [#allocation2], 8
  %v335 = vld [vmem:[%s334] sm:$0xff]
  %s336 = scalar_lea.vmem %s1, 64
  %v337 = vld [vmem:[%s336] sm:$0xff]
  %v338 = vld [vmem:[%s336 + $0x8] sm:$0xff]
  %v339 = vld [vmem:[%s336 + $0x10] sm:$0xff]
  %v340 = vld [vmem:[%s336 + $0x18] sm:$0xff]
  %v341 = vld [vmem:[%s336 + $0x20] sm:$0xff]
  %v342 = vld [vmem:[%s336 + $0x28] sm:$0xff]
  %v343 = vld [vmem:[%s336 + $0x30] sm:$0xff]
  %v344 = vld [vmem:[%s336 + $0x38] sm:$0xff]
  %345 = vmatpush.msra.mxu0 %v49
  %346 = vmatpush.msra.mxu0 %v48
  %347 = vmatpush.msra.mxu0 %v47
  %348 = vmatpush.msra.mxu0 %v46
  %349 = vmatpush.msra.mxu0 %v45
  %350 = vmatpush.msra.mxu0 %v44
  %351 = vmatpush.msra.mxu0 %v43
  %352 = vmatpush.msra.mxu0 %v42
  %353 = vmatpush.msra.mxu0 %v41
  %354 = vmatpush.msra.mxu0 %v40
  %355 = vmatpush.msra.mxu0 %v39
  %356 = vmatpush.msra.mxu0 %v38
  %357 = vmatpush.msra.mxu0 %v37
  %358 = vmatpush.msra.mxu0 %v36
  %359 = vmatpush.msra.mxu0 %v35
  %360 = vmatpush.msra.mxu0 %v34
  %361 = vmatmul.f32.gmra.mxu0 %v337
  %v362 = vpop.f32.mrf.mxu0
  %v363 = vadd.f32 0.0, %v362
  %364 = vdwg.mxu0
  %365 = vmatpush.msra.mxu0 %v65
  %366 = vmatpush.msra.mxu0 %v64
  %367 = vmatpush.msra.mxu0 %v63
  %368 = vmatpush.msra.mxu0 %v62
  %369 = vmatpush.msra.mxu0 %v61
  %370 = vmatpush.msra.mxu0 %v60
  %371 = vmatpush.msra.mxu0 %v59
  %372 = vmatpush.msra.mxu0 %v58
  %373 = vmatpush.msra.mxu0 %v57
  %374 = vmatpush.msra.mxu0 %v56
  %375 = vmatpush.msra.mxu0 %v55
  %376 = vmatpush.msra.mxu0 %v54
  %377 = vmatpush.msra.mxu0 %v53
  %378 = vmatpush.msra.mxu0 %v52
  %379 = vmatpush.msra.mxu0 %v51
  %380 = vmatpush.msra.mxu0 %v50
  %381 = vmatmul.f32.gmra.mxu0 %v338
  %v382 = vpop.f32.mrf.mxu0
  %v383 = vadd.f32 %v363, %v382
  %384 = vdwg.mxu0
  %385 = vmatpush.msra.mxu0 %v81
  %386 = vmatpush.msra.mxu0 %v80
  %387 = vmatpush.msra.mxu0 %v79
  %388 = vmatpush.msra.mxu0 %v78
  %389 = vmatpush.msra.mxu0 %v77
  %390 = vmatpush.msra.mxu0 %v76
  %391 = vmatpush.msra.mxu0 %v75
  %392 = vmatpush.msra.mxu0 %v74
  %393 = vmatpush.msra.mxu0 %v73
  %394 = vmatpush.msra.mxu0 %v72
  %395 = vmatpush.msra.mxu0 %v71
  %396 = vmatpush.msra.mxu0 %v70
  %397 = vmatpush.msra.mxu0 %v69
  %398 = vmatpush.msra.mxu0 %v68
  %399 = vmatpush.msra.mxu0 %v67
  %400 = vmatpush.msra.mxu0 %v66
  %401 = vmatmul.f32.gmra.mxu0 %v339
  %v402 = vpop.f32.mrf.mxu0
  %v403 = vadd.f32 %v383, %v402
  %404 = vdwg.mxu0
  %405 = vmatpush.msra.mxu0 %v97
  %406 = vmatpush.msra.mxu0 %v96
  %407 = vmatpush.msra.mxu0 %v95
  %408 = vmatpush.msra.mxu0 %v94
  %409 = vmatpush.msra.mxu0 %v93
  %410 = vmatpush.msra.mxu0 %v92
  %411 = vmatpush.msra.mxu0 %v91
  %412 = vmatpush.msra.mxu0 %v90
  %413 = vmatpush.msra.mxu0 %v89
  %414 = vmatpush.msra.mxu0 %v88
  %415 = vmatpush.msra.mxu0 %v87
  %416 = vmatpush.msra.mxu0 %v86
  %417 = vmatpush.msra.mxu0 %v85
  %418 = vmatpush.msra.mxu0 %v84
  %419 = vmatpush.msra.mxu0 %v83
  %420 = vmatpush.msra.mxu0 %v82
  %421 = vmatmul.f32.gmra.mxu0 %v340
  %v422 = vpop.f32.mrf.mxu0
  %v423 = vadd.f32 %v403, %v422
  %424 = vdwg.mxu0
  %425 = vmatpush.msra.mxu0 %v113
  %426 = vmatpush.msra.mxu0 %v112
  %427 = vmatpush.msra.mxu0 %v111
  %428 = vmatpush.msra.mxu0 %v110
  %429 = vmatpush.msra.mxu0 %v109
  %430 = vmatpush.msra.mxu0 %v108
  %431 = vmatpush.msra.mxu0 %v107
  %432 = vmatpush.msra.mxu0 %v106
  %433 = vmatpush.msra.mxu0 %v105
  %434 = vmatpush.msra.mxu0 %v104
  %435 = vmatpush.msra.mxu0 %v103
  %436 = vmatpush.msra.mxu0 %v102
  %437 = vmatpush.msra.mxu0 %v101
  %438 = vmatpush.msra.mxu0 %v100
  %439 = vmatpush.msra.mxu0 %v99
  %440 = vmatpush.msra.mxu0 %v98
  %441 = vmatmul.f32.gmra.mxu0 %v341
  %v442 = vpop.f32.mrf.mxu0
  %v443 = vadd.f32 %v423, %v442
  %444 = vdwg.mxu0
  %445 = vmatpush.msra.mxu0 %v129
  %446 = vmatpush.msra.mxu0 %v128
  %447 = vmatpush.msra.mxu0 %v127
  %448 = vmatpush.msra.mxu0 %v126
  %449 = vmatpush.msra.mxu0 %v125
  %450 = vmatpush.msra.mxu0 %v124
  %451 = vmatpush.msra.mxu0 %v123
  %452 = vmatpush.msra.mxu0 %v122
  %453 = vmatpush.msra.mxu0 %v121
  %454 = vmatpush.msra.mxu0 %v120
  %455 = vmatpush.msra.mxu0 %v119
  %456 = vmatpush.msra.mxu0 %v118
  %457 = vmatpush.msra.mxu0 %v117
  %458 = vmatpush.msra.mxu0 %v116
  %459 = vmatpush.msra.mxu0 %v115
  %460 = vmatpush.msra.mxu0 %v114
  %461 = vmatmul.f32.gmra.mxu0 %v342
  %v462 = vpop.f32.mrf.mxu0
  %v463 = vadd.f32 %v443, %v462
  %464 = vdwg.mxu0
  %465 = vmatpush.msra.mxu0 %v145
  %466 = vmatpush.msra.mxu0 %v144
  %467 = vmatpush.msra.mxu0 %v143
  %468 = vmatpush.msra.mxu0 %v142
  %469 = vmatpush.msra.mxu0 %v141
  %470 = vmatpush.msra.mxu0 %v140
  %471 = vmatpush.msra.mxu0 %v139
  %472 = vmatpush.msra.mxu0 %v138
  %473 = vmatpush.msra.mxu0 %v137
  %474 = vmatpush.msra.mxu0 %v136
  %475 = vmatpush.msra.mxu0 %v135
  %476 = vmatpush.msra.mxu0 %v134
  %477 = vmatpush.msra.mxu0 %v133
  %478 = vmatpush.msra.mxu0 %v132
  %479 = vmatpush.msra.mxu0 %v131
  %480 = vmatpush.msra.mxu0 %v130
  %481 = vmatmul.f32.gmra.mxu0 %v343
  %v482 = vpop.f32.mrf.mxu0
  %v483 = vadd.f32 %v463, %v482
  %484 = vdwg.mxu0
  %485 = vmatpush.msra.mxu0 %v161
  %486 = vmatpush.msra.mxu0 %v160
  %487 = vmatpush.msra.mxu0 %v159
  %488 = vmatpush.msra.mxu0 %v158
  %489 = vmatpush.msra.mxu0 %v157
  %490 = vmatpush.msra.mxu0 %v156
  %491 = vmatpush.msra.mxu0 %v155
  %492 = vmatpush.msra.mxu0 %v154
  %493 = vmatpush.msra.mxu0 %v153
  %494 = vmatpush.msra.mxu0 %v152
  %495 = vmatpush.msra.mxu0 %v151
  %496 = vmatpush.msra.mxu0 %v150
  %497 = vmatpush.msra.mxu0 %v149
  %498 = vmatpush.msra.mxu0 %v148
  %499 = vmatpush.msra.mxu0 %v147
  %500 = vmatpush.msra.mxu0 %v146
  %501 = vmatmul.f32.gmra.mxu0 %v344
  %v502 = vpop.f32.mrf.mxu0
  %v503 = vadd.f32 %v483, %v502
  %504 = vdwg.mxu0
  %v505 = vadd.f32 %v335, %v503
  %506 = vst.msk [vmem:[%s334] sm:$0xff] %vm332, %v505
  %s507 = scalar_lea.vmem [#allocation2], 16
  %v508 = vld [vmem:[%s507] sm:$0xff]
  %s509 = scalar_lea.vmem %s1, 128
  %v510 = vld [vmem:[%s509] sm:$0xff]
  %v511 = vld [vmem:[%s509 + $0x8] sm:$0xff]
  %v512 = vld [vmem:[%s509 + $0x10] sm:$0xff]
  %v513 = vld [vmem:[%s509 + $0x18] sm:$0xff]
  %v514 = vld [vmem:[%s509 + $0x20] sm:$0xff]
  %v515 = vld [vmem:[%s509 + $0x28] sm:$0xff]
  %v516 = vld [vmem:[%s509 + $0x30] sm:$0xff]
  %v517 = vld [vmem:[%s509 + $0x38] sm:$0xff]
  %518 = vmatpush.msra.mxu0 %v49
  %519 = vmatpush.msra.mxu0 %v48
  %520 = vmatpush.msra.mxu0 %v47
  %521 = vmatpush.msra.mxu0 %v46
  %522 = vmatpush.msra.mxu0 %v45
  %523 = vmatpush.msra.mxu0 %v44
  %524 = vmatpush.msra.mxu0 %v43
  %525 = vmatpush.msra.mxu0 %v42
  %526 = vmatpush.msra.mxu0 %v41
  %527 = vmatpush.msra.mxu0 %v40
  %528 = vmatpush.msra.mxu0 %v39
  %529 = vmatpush.msra.mxu0 %v38
  %530 = vmatpush.msra.mxu0 %v37
  %531 = vmatpush.msra.mxu0 %v36
  %532 = vmatpush.msra.mxu0 %v35
  %533 = vmatpush.msra.mxu0 %v34
  %534 = vmatmul.f32.gmra.mxu0 %v510
  %v535 = vpop.f32.mrf.mxu0
  %v536 = vadd.f32 0.0, %v535
  %537 = vdwg.mxu0
  %538 = vmatpush.msra.mxu0 %v65
  %539 = vmatpush.msra.mxu0 %v64
  %540 = vmatpush.msra.mxu0 %v63
  %541 = vmatpush.msra.mxu0 %v62
  %542 = vmatpush.msra.mxu0 %v61
  %543 = vmatpush.msra.mxu0 %v60
  %544 = vmatpush.msra.mxu0 %v59
  %545 = vmatpush.msra.mxu0 %v58
  %546 = vmatpush.msra.mxu0 %v57
  %547 = vmatpush.msra.mxu0 %v56
  %548 = vmatpush.msra.mxu0 %v55
  %549 = vmatpush.msra.mxu0 %v54
  %550 = vmatpush.msra.mxu0 %v53
  %551 = vmatpush.msra.mxu0 %v52
  %552 = vmatpush.msra.mxu0 %v51
  %553 = vmatpush.msra.mxu0 %v50
  %554 = vmatmul.f32.gmra.mxu0 %v511
  %v555 = vpop.f32.mrf.mxu0
  %v556 = vadd.f32 %v536, %v555
  %557 = vdwg.mxu0
  %558 = vmatpush.msra.mxu0 %v81
  %559 = vmatpush.msra.mxu0 %v80
  %560 = vmatpush.msra.mxu0 %v79
  %561 = vmatpush.msra.mxu0 %v78
  %562 = vmatpush.msra.mxu0 %v77
  %563 = vmatpush.msra.mxu0 %v76
  %564 = vmatpush.msra.mxu0 %v75
  %565 = vmatpush.msra.mxu0 %v74
  %566 = vmatpush.msra.mxu0 %v73
  %567 = vmatpush.msra.mxu0 %v72
  %568 = vmatpush.msra.mxu0 %v71
  %569 = vmatpush.msra.mxu0 %v70
  %570 = vmatpush.msra.mxu0 %v69
  %571 = vmatpush.msra.mxu0 %v68
  %572 = vmatpush.msra.mxu0 %v67
  %573 = vmatpush.msra.mxu0 %v66
  %574 = vmatmul.f32.gmra.mxu0 %v512
  %v575 = vpop.f32.mrf.mxu0
  %v576 = vadd.f32 %v556, %v575
  %577 = vdwg.mxu0
  %578 = vmatpush.msra.mxu0 %v97
  %579 = vmatpush.msra.mxu0 %v96
  %580 = vmatpush.msra.mxu0 %v95
  %581 = vmatpush.msra.mxu0 %v94
  %582 = vmatpush.msra.mxu0 %v93
  %583 = vmatpush.msra.mxu0 %v92
  %584 = vmatpush.msra.mxu0 %v91
  %585 = vmatpush.msra.mxu0 %v90
  %586 = vmatpush.msra.mxu0 %v89
  %587 = vmatpush.msra.mxu0 %v88
  %588 = vmatpush.msra.mxu0 %v87
  %589 = vmatpush.msra.mxu0 %v86
  %590 = vmatpush.msra.mxu0 %v85
  %591 = vmatpush.msra.mxu0 %v84
  %592 = vmatpush.msra.mxu0 %v83
  %593 = vmatpush.msra.mxu0 %v82
  %594 = vmatmul.f32.gmra.mxu0 %v513
  %v595 = vpop.f32.mrf.mxu0
  %v596 = vadd.f32 %v576, %v595
  %597 = vdwg.mxu0
  %598 = vmatpush.msra.mxu0 %v113
  %599 = vmatpush.msra.mxu0 %v112
  %600 = vmatpush.msra.mxu0 %v111
  %601 = vmatpush.msra.mxu0 %v110
  %602 = vmatpush.msra.mxu0 %v109
  %603 = vmatpush.msra.mxu0 %v108
  %604 = vmatpush.msra.mxu0 %v107
  %605 = vmatpush.msra.mxu0 %v106
  %606 = vmatpush.msra.mxu0 %v105
  %607 = vmatpush.msra.mxu0 %v104
  %608 = vmatpush.msra.mxu0 %v103
  %609 = vmatpush.msra.mxu0 %v102
  %610 = vmatpush.msra.mxu0 %v101
  %611 = vmatpush.msra.mxu0 %v100
  %612 = vmatpush.msra.mxu0 %v99
  %613 = vmatpush.msra.mxu0 %v98
  %614 = vmatmul.f32.gmra.mxu0 %v514
  %v615 = vpop.f32.mrf.mxu0
  %v616 = vadd.f32 %v596, %v615
  %617 = vdwg.mxu0
  %618 = vmatpush.msra.mxu0 %v129
  %619 = vmatpush.msra.mxu0 %v128
  %620 = vmatpush.msra.mxu0 %v127
  %621 = vmatpush.msra.mxu0 %v126
  %622 = vmatpush.msra.mxu0 %v125
  %623 = vmatpush.msra.mxu0 %v124
  %624 = vmatpush.msra.mxu0 %v123
  %625 = vmatpush.msra.mxu0 %v122
  %626 = vmatpush.msra.mxu0 %v121
  %627 = vmatpush.msra.mxu0 %v120
  %628 = vmatpush.msra.mxu0 %v119
  %629 = vmatpush.msra.mxu0 %v118
  %630 = vmatpush.msra.mxu0 %v117
  %631 = vmatpush.msra.mxu0 %v116
  %632 = vmatpush.msra.mxu0 %v115
  %633 = vmatpush.msra.mxu0 %v114
  %634 = vmatmul.f32.gmra.mxu0 %v515
  %v635 = vpop.f32.mrf.mxu0
  %v636 = vadd.f32 %v616, %v635
  %637 = vdwg.mxu0
  %638 = vmatpush.msra.mxu0 %v145
  %639 = vmatpush.msra.mxu0 %v144
  %640 = vmatpush.msra.mxu0 %v143
  %641 = vmatpush.msra.mxu0 %v142
  %642 = vmatpush.msra.mxu0 %v141
  %643 = vmatpush.msra.mxu0 %v140
  %644 = vmatpush.msra.mxu0 %v139
  %645 = vmatpush.msra.mxu0 %v138
  %646 = vmatpush.msra.mxu0 %v137
  %647 = vmatpush.msra.mxu0 %v136
  %648 = vmatpush.msra.mxu0 %v135
  %649 = vmatpush.msra.mxu0 %v134
  %650 = vmatpush.msra.mxu0 %v133
  %651 = vmatpush.msra.mxu0 %v132
  %652 = vmatpush.msra.mxu0 %v131
  %653 = vmatpush.msra.mxu0 %v130
  %654 = vmatmul.f32.gmra.mxu0 %v516
  %v655 = vpop.f32.mrf.mxu0
  %v656 = vadd.f32 %v636, %v655
  %657 = vdwg.mxu0
  %658 = vmatpush.msra.mxu0 %v161
  %659 = vmatpush.msra.mxu0 %v160
  %660 = vmatpush.msra.mxu0 %v159
  %661 = vmatpush.msra.mxu0 %v158
  %662 = vmatpush.msra.mxu0 %v157
  %663 = vmatpush.msra.mxu0 %v156
  %664 = vmatpush.msra.mxu0 %v155
  %665 = vmatpush.msra.mxu0 %v154
  %666 = vmatpush.msra.mxu0 %v153
  %667 = vmatpush.msra.mxu0 %v152
  %668 = vmatpush.msra.mxu0 %v151
  %669 = vmatpush.msra.mxu0 %v150
  %670 = vmatpush.msra.mxu0 %v149
  %671 = vmatpush.msra.mxu0 %v148
  %672 = vmatpush.msra.mxu0 %v147
  %673 = vmatpush.msra.mxu0 %v146
  %674 = vmatmul.f32.gmra.mxu0 %v517
  %v675 = vpop.f32.mrf.mxu0
  %v676 = vadd.f32 %v656, %v675
  %677 = vdwg.mxu0
  %v678 = vadd.f32 %v508, %v676
  %679 = vst.msk [vmem:[%s507] sm:$0xff] %vm332, %v678
  // Predicated region
  $region34: #{clipikea_colearn_forward.1} parent=0 // pred_check
    %p680 = pneg %p26
  $region35: #{clipikea_colearn_forward.1} parent=0 // pred_check_branch
    %682 = sbr.rel (%p680) target = $region37
  $region36: #{clipikea_colearn_forward.1} parent=0 // pred_region
    %v683 = vld [vmem:[%s0] sm:$0xff]
    %vm684 = vcmask 523264
    %685 = vst.msk [vmem:[#allocation3] sm:$0xff] %vm684, %v683
    %v686 = vld [vmem:[#allocation2] sm:$0xff]
    %688 = vrot.lane.b32.xlu0 %v686, 64
    %v689 = vpop.permute.xlu0 %688
    %vm691 = vcmask 785920
    %692 = vst.msk [vmem:[#allocation3] sm:$0xff] %vm691, %v689
    %v693 = vld [vmem:[%s334] sm:$0xff]
    %695 = vrot.lane.b32.xlu0 %v693, 96
    %v696 = vpop.permute.xlu0 %695
    %vm698 = vcmask 1048320
    %699 = vst.msk [vmem:[#allocation3] sm:$0xff] %vm698, %v696
    %v700 = vld [vmem:[%s507] sm:$0xff]
    %701 = vst.msk [vmem:[#allocation3 + $0x8] sm:$0xff] %vm332, %v700
    %v702 = vld [vmem:[#allocation3] sm:$0xff]
    %v703 = vld [vmem:[#allocation3 + $0x8] sm:$0xff]
    %v704 = vld [vmem:[%s3] sm:$0xff]
    %v705 = vld [vmem:[%s3 + $0x8] sm:$0xff]
    %v706 = vld [vmem:[%s3 + $0x10] sm:$0xff]
    %v707 = vld [vmem:[%s3 + $0x18] sm:$0xff]
    %v708 = vld [vmem:[%s3 + $0x20] sm:$0xff]
    %v709 = vld [vmem:[%s3 + $0x28] sm:$0xff]
    %v710 = vld [vmem:[%s3 + $0x30] sm:$0xff]
    %v711 = vld [vmem:[%s3 + $0x38] sm:$0xff]
    %v712 = vld [vmem:[%s3 + $0x40] sm:$0xff]
    %v713 = vld [vmem:[%s3 + $0x48] sm:$0xff]
    %v714 = vld [vmem:[%s3 + $0x50] sm:$0xff]
    %v715 = vld [vmem:[%s3 + $0x58] sm:$0xff]
    %v716 = vld [vmem:[%s3 + $0x60] sm:$0xff]
    %v717 = vld [vmem:[%s3 + $0x68] sm:$0xff]
    %v718 = vld [vmem:[%s3 + $0x70] sm:$0xff]
    %v719 = vld [vmem:[%s3 + $0x78] sm:$0xff]
    %v720 = vld [vmem:[%s3 + $0x80] sm:$0xff]
    %v721 = vld [vmem:[%s3 + $0x88] sm:$0xff]
    %v722 = vld [vmem:[%s3 + $0x90] sm:$0xff]
    %v723 = vld [vmem:[%s3 + $0x98] sm:$0xff]
    %v724 = vld [vmem:[%s3 + $0xa0] sm:$0xff]
    %v725 = vld [vmem:[%s3 + $0xa8] sm:$0xff]
    %v726 = vld [vmem:[%s3 + $0xb0] sm:$0xff]
    %v727 = vld [vmem:[%s3 + $0xb8] sm:$0xff]
    %v728 = vld [vmem:[%s3 + $0xc0] sm:$0xff]
    %v729 = vld [vmem:[%s3 + $0xc8] sm:$0xff]
    %v730 = vld [vmem:[%s3 + $0xd0] sm:$0xff]
    %v731 = vld [vmem:[%s3 + $0xd8] sm:$0xff]
    %v732 = vld [vmem:[%s3 + $0xe0] sm:$0xff]
    %v733 = vld [vmem:[%s3 + $0xe8] sm:$0xff]
    %v734 = vld [vmem:[%s3 + $0xf0] sm:$0xff]
    %v735 = vld [vmem:[%s3 + $0xf8] sm:$0xff]
    %v736 = vld [vmem:[%s3 + $0x100] sm:$0xff]
    %v737 = vld [vmem:[%s3 + $0x108] sm:$0xff]
    %v738 = vld [vmem:[%s3 + $0x110] sm:$0xff]
    %v739 = vld [vmem:[%s3 + $0x118] sm:$0xff]
    %v740 = vld [vmem:[%s3 + $0x120] sm:$0xff]
    %v741 = vld [vmem:[%s3 + $0x128] sm:$0xff]
    %v742 = vld [vmem:[%s3 + $0x130] sm:$0xff]
    %v743 = vld [vmem:[%s3 + $0x138] sm:$0xff]
    %v744 = vld [vmem:[%s4] sm:$0x3]
    %v746 = vperm.slane %v744, 0
    %v747 = vperm.slane %v744, 1
    %v751 = vsel %vm332, %v703, 0
    %753 = vmatpush.msra.mxu0 %v734
    %754 = vmatpush.msra.mxu0 %v732
    %755 = vmatpush.msra.mxu0 %v730
    %756 = vmatpush.msra.mxu0 %v728
    %757 = vmatpush.msra.mxu0 %v726
    %758 = vmatpush.msra.mxu0 %v724
    %759 = vmatpush.msra.mxu0 %v722
    %760 = vmatpush.msra.mxu0 %v720
    %761 = vmatpush.msra.mxu0 %v718
    %762 = vmatpush.msra.mxu0 %v716
    %763 = vmatpush.msra.mxu0 %v714
    %764 = vmatpush.msra.mxu0 %v712
    %765 = vmatpush.msra.mxu0 %v710
    %766 = vmatpush.msra.mxu0 %v708
    %767 = vmatpush.msra.mxu0 %v706
    %768 = vmatpush.msra.mxu0 %v704
    %769 = vmatmul.f32.gmra.mxu0 %v702
    %v770 = vpop.f32.mrf.mxu0
    %v771 = vadd.f32 %v746, %v770
    %772 = vdwg.mxu0
    %773 = vmatpush.msra.mxu0 0.0
    %774 = vmatpush.msra.mxu0 0.0
    %775 = vmatpush.msra.mxu0 0.0
    %776 = vmatpush.msra.mxu0 0.0
    %777 = vmatpush.msra.mxu0 0.0
    %778 = vmatpush.msra.mxu0 0.0
    %779 = vmatpush.msra.mxu0 0.0
    %780 = vmatpush.msra.mxu0 0.0
    %781 = vmatpush.msra.mxu0 0.0
    %782 = vmatpush.msra.mxu0 0.0
    %783 = vmatpush.msra.mxu0 0.0
    %784 = vmatpush.msra.mxu0 0.0
    %785 = vmatpush.msra.mxu0 %v742
    %786 = vmatpush.msra.mxu0 %v740
    %787 = vmatpush.msra.mxu0 %v738
    %788 = vmatpush.msra.mxu0 %v736
    %789 = vmatmul.f32.gmra.mxu0 %v751
    %v790 = vpop.f32.mrf.mxu0
    %v791 = vadd.f32 %v771, %v790
    %792 = vdwg.mxu0
    %793 = vmatpush.msra.mxu0 %v735
    %794 = vmatpush.msra.mxu0 %v733
    %795 = vmatpush.msra.mxu0 %v731
    %796 = vmatpush.msra.mxu0 %v729
    %797 = vmatpush.msra.mxu0 %v727
    %798 = vmatpush.msra.mxu0 %v725
    %799 = vmatpush.msra.mxu0 %v723
    %800 = vmatpush.msra.mxu0 %v721
    %801 = vmatpush.msra.mxu0 %v719
    %802 = vmatpush.msra.mxu0 %v717
    %803 = vmatpush.msra.mxu0 %v715
    %804 = vmatpush.msra.mxu0 %v713
    %805 = vmatpush.msra.mxu0 %v711
    %806 = vmatpush.msra.mxu0 %v709
    %807 = vmatpush.msra.mxu0 %v707
    %808 = vmatpush.msra.mxu0 %v705
    %809 = vmatmul.f32.gmra.mxu0 %v702
    %v810 = vpop.f32.mrf.mxu0
    %v811 = vadd.f32 %v747, %v810
    %812 = vdwg.mxu0
    %813 = vmatpush.msra.mxu0 0.0
    %814 = vmatpush.msra.mxu0 0.0
    %815 = vmatpush.msra.mxu0 0.0
    %816 = vmatpush.msra.mxu0 0.0
    %817 = vmatpush.msra.mxu0 0.0
    %818 = vmatpush.msra.mxu0 0.0
    %819 = vmatpush.msra.mxu0 0.0
    %820 = vmatpush.msra.mxu0 0.0
    %821 = vmatpush.msra.mxu0 0.0
    %822 = vmatpush.msra.mxu0 0.0
    %823 = vmatpush.msra.mxu0 0.0
    %824 = vmatpush.msra.mxu0 0.0
    %825 = vmatpush.msra.mxu0 %v743
    %826 = vmatpush.msra.mxu0 %v741
    %827 = vmatpush.msra.mxu0 %v739
    %828 = vmatpush.msra.mxu0 %v737
    %829 = vmatmul.f32.gmra.mxu0 %v751
    %v830 = vpop.f32.mrf.mxu0
    %v831 = vadd.f32 %v811, %v830
    %832 = vdwg.mxu0
    %v833 = vmax.f32 %v791, 0.0
    %v834 = vmax.f32 %v831, 0.0
    %v835 = vld [vmem:[%s5] sm:$0xff]
    %v836 = vld [vmem:[%s5 + $0x8] sm:$0xff]
    %v837 = vld [vmem:[%s5 + $0x10] sm:$0xff]
    %v838 = vld [vmem:[%s5 + $0x18] sm:$0xff]
    %v839 = vld [vmem:[%s5 + $0x20] sm:$0xff]
    %v840 = vld [vmem:[%s5 + $0x28] sm:$0xff]
    %v841 = vld [vmem:[%s5 + $0x30] sm:$0xff]
    %v842 = vld [vmem:[%s5 + $0x38] sm:$0xff]
    %v843 = vld [vmem:[%s5 + $0x40] sm:$0xff]
    %v844 = vld [vmem:[%s5 + $0x48] sm:$0xff]
    %v845 = vld [vmem:[%s5 + $0x50] sm:$0xff]
    %v846 = vld [vmem:[%s5 + $0x58] sm:$0xff]
    %v847 = vld [vmem:[%s5 + $0x60] sm:$0xff]
    %v848 = vld [vmem:[%s5 + $0x68] sm:$0xff]
    %v849 = vld [vmem:[%s5 + $0x70] sm:$0xff]
    %v850 = vld [vmem:[%s5 + $0x78] sm:$0xff]
    %v851 = vld [vmem:[%s5 + $0x80] sm:$0xff]
    %v852 = vld [vmem:[%s5 + $0x88] sm:$0xff]
    %v853 = vld [vmem:[%s5 + $0x90] sm:$0xff]
    %v854 = vld [vmem:[%s5 + $0x98] sm:$0xff]
    %v855 = vld [vmem:[%s5 + $0xa0] sm:$0xff]
    %v856 = vld [vmem:[%s5 + $0xa8] sm:$0xff]
    %v857 = vld [vmem:[%s5 + $0xb0] sm:$0xff]
    %v858 = vld [vmem:[%s5 + $0xb8] sm:$0xff]
    %v859 = vld [vmem:[%s5 + $0xc0] sm:$0xff]
    %v860 = vld [vmem:[%s5 + $0xc8] sm:$0xff]
    %v861 = vld [vmem:[%s5 + $0xd0] sm:$0xff]
    %v862 = vld [vmem:[%s5 + $0xd8] sm:$0xff]
    %v863 = vld [vmem:[%s5 + $0xe0] sm:$0xff]
    %v864 = vld [vmem:[%s5 + $0xe8] sm:$0xff]
    %v865 = vld [vmem:[%s5 + $0xf0] sm:$0xff]
    %v866 = vld [vmem:[%s5 + $0xf8] sm:$0xff]
    %v867 = vld [vmem:[%s6] sm:$0x1]
    %v869 = vperm.slane %v867, 0
    %871 = vmatpush.msra.mxu0 %v850
    %872 = vmatpush.msra.mxu0 %v849
    %873 = vmatpush.msra.mxu0 %v848
    %874 = vmatpush.msra.mxu0 %v847
    %875 = vmatpush.msra.mxu0 %v846
    %876 = vmatpush.msra.mxu0 %v845
    %877 = vmatpush.msra.mxu0 %v844
    %878 = vmatpush.msra.mxu0 %v843
    %879 = vmatpush.msra.mxu0 %v842
    %880 = vmatpush.msra.mxu0 %v841
    %881 = vmatpush.msra.mxu0 %v840
    %882 = vmatpush.msra.mxu0 %v839
    %883 = vmatpush.msra.mxu0 %v838
    %884 = vmatpush.msra.mxu0 %v837
    %885 = vmatpush.msra.mxu0 %v836
    %886 = vmatpush.msra.mxu0 %v835
    %887 = vmatmul.f32.gmra.mxu0 %v833
    %v888 = vpop.f32.mrf.mxu0
    %v889 = vadd.f32 %v869, %v888
    %890 = vdwg.mxu0
    %891 = vmatpush.msra.mxu0 %v866
    %892 = vmatpush.msra.mxu0 %v865
    %893 = vmatpush.msra.mxu0 %v864
    %894 = vmatpush.msra.mxu0 %v863
    %895 = vmatpush.msra.mxu0 %v862
    %896 = vmatpush.msra.mxu0 %v861
    %897 = vmatpush.msra.mxu0 %v860
    %898 = vmatpush.msra.mxu0 %v859
    %899 = vmatpush.msra.mxu0 %v858
    %900 = vmatpush.msra.mxu0 %v857
    %901 = vmatpush.msra.mxu0 %v856
    %902 = vmatpush.msra.mxu0 %v855
    %903 = vmatpush.msra.mxu0 %v854
    %904 = vmatpush.msra.mxu0 %v853
    %905 = vmatpush.msra.mxu0 %v852
    %906 = vmatpush.msra.mxu0 %v851
    %907 = vmatmul.f32.gmra.mxu0 %v834
    %v908 = vpop.f32.mrf.mxu0
    %v909 = vadd.f32 %v889, %v908
    %910 = vdwg.mxu0
    %911 = vst [vmem:[%s7] sm:$0xff] %v909
  $region37: #{clipikea_colearn_forward.1} parent=0 // pred_fallthru
    _
  // Predicated region
  $region38: #{clipikea_colearn_forward.1} parent=0 // pred_check
    _
  $region39: #{clipikea_colearn_forward.1} parent=0 // pred_check_branch
    %913 = sbr.rel (0) target = $region41
  $region40: #{clipikea_colearn_forward.1} parent=0 // pred_region
    _
  $region41: #{clipikea_colearn_forward.1} parent=0 // pred_fallthru
    _
  // Predicated region
  $region42: #{clipikea_colearn_forward.1} parent=0 // pred_check
    _
  $region43: #{clipikea_colearn_forward.1} parent=0 // pred_check_branch
    %915 = sbr.rel (0) target = $region45
  $region44: #{clipikea_colearn_forward.1} parent=0 // pred_region
    _
  $region45: #{clipikea_colearn_forward.1} parent=0 // pred_fallthru
    _

// kernel: clipikea_colearn_forward.1
$region0: #{clipikea_colearn_forward.1}
  #allocation0 [shape = 'u32[]', space=smem, size = 0x4, offset = 0x4, fixed_abs, tag = 'smem constant byte address 0x4 - core index']
  #allocation1 [shape = 'u32[72,128]{1,0:T(1,128)}', space=vmem, size = 0x9000, scoped, tag = 'internal scratch']
  #allocation2 [shape = 'f32[3,8,32]{2,1,0:T(8,128)}', space=vmem, size = 0x3000, scoped, tag = 'scratch operand']
  #allocation3 [shape = 'f32[8,160]{1,0:T(8,128)}', space=vmem, size = 0x2000, scoped, tag = 'scratch operand']
  %s0 = inlined_call_operand.vmem [shape: f32[8,64], index: 0, kind: input, shape index: {}]
  %s1 = inlined_call_operand.vmem [shape: f32[3,8,1024], index: 1, kind: input, shape index: {}]
  %s2 = inlined_call_operand.vmem [shape: f32[1024,32], index: 2, kind: input, shape index: {}]
  %s3 = inlined_call_operand.vmem [shape: f32[160,256], index: 3, kind: input, shape index: {}]
  %s4 = inlined_call_operand.vmem [shape: f32[1,256], index: 4, kind: input, shape index: {}]
  %s5 = inlined_call_operand.vmem [shape: f32[256,128], index: 5, kind: input, shape index: {}]
  %s6 = inlined_call_operand.vmem [shape: f32[1,128], index: 6, kind: input, shape index: {}]
  %s7 = inlined_call_operand.vmem [shape: f32[8,128], index: 7, kind: output, shape index: {}]
  %s8 = sld [smem:[#allocation0]]
  $region46: #{clipikea_colearn_forward.1} parent=0
    _
  %s10 = ssub.s32 1, %s8
  %s11 = scalar_select 0, %s10, %s8
  // Predicated region
  $region2: #{clipikea_colearn_forward.1} parent=0 // pred_check
    _
  $region3: #{clipikea_colearn_forward.1} parent=0 // pred_check_branch
    %13 = sbr.rel (0) target = $region5
  $region4: #{clipikea_colearn_forward.1} parent=0 // pred_region
    _
  $region5: #{clipikea_colearn_forward.1} parent=0 // pred_fallthru
    _
  // Predicated region
  $region6: #{clipikea_colearn_forward.1} parent=0 // pred_check
    _
  $region7: #{clipikea_colearn_forward.1} parent=0 // pred_check_branch
    %15 = sbr.rel (0) target = $region9
  $region8: #{clipikea_colearn_forward.1} parent=0 // pred_region
    _
  $region9: #{clipikea_colearn_forward.1} parent=0 // pred_fallthru
    _
  // Predicated region
  $region10: #{clipikea_colearn_forward.1} parent=0 // pred_check
    _
  $region11: #{clipikea_colearn_forward.1} parent=0 // pred_check_branch
    %17 = sbr.rel (0) target = $region13
  $region12: #{clipikea_colearn_forward.1} parent=0 // pred_region
    _
  $region13: #{clipikea_colearn_forward.1} parent=0 // pred_fallthru
    _
  // Predicated region
  $region14: #{clipikea_colearn_forward.1} parent=0 // pred_check
    _
  $region15: #{clipikea_colearn_forward.1} parent=0 // pred_check_branch
    %19 = sbr.rel (0) target = $region17
  $region16: #{clipikea_colearn_forward.1} parent=0 // pred_region
    _
  $region17: #{clipikea_colearn_forward.1} parent=0 // pred_fallthru
    _
  // Predicated region
  $region18: #{clipikea_colearn_forward.1} parent=0 // pred_check
    _
  $region19: #{clipikea_colearn_forward.1} parent=0 // pred_check_branch
    %21 = sbr.rel (0) target = $region21
  $region20: #{clipikea_colearn_forward.1} parent=0 // pred_region
    _
  $region21: #{clipikea_colearn_forward.1} parent=0 // pred_fallthru
    _
  // Predicated region
  $region22: #{clipikea_colearn_forward.1} parent=0 // pred_check
    _
  $region23: #{clipikea_colearn_forward.1} parent=0 // pred_check_branch
    %23 = sbr.rel (0) target = $region25
  $region24: #{clipikea_colearn_forward.1} parent=0 // pred_region
    _
  $region25: #{clipikea_colearn_forward.1} parent=0 // pred_fallthru
    _
  // Predicated region
  $region26: #{clipikea_colearn_forward.1} parent=0 // pred_check
    _
  $region27: #{clipikea_colearn_forward.1} parent=0 // pred_check_branch
    %25 = sbr.rel (0) target = $region29
  $region28: #{clipikea_colearn_forward.1} parent=0 // pred_region
    _
  $region29: #{clipikea_colearn_forward.1} parent=0 // pred_fallthru
    _
  %p26 = scmp.eq.s32.totalorder 0, 0
  // Predicated region
  $region30: #{clipikea_colearn_forward.1} parent=0 // pred_check
    %p27 = pneg %p26
  $region31: #{clipikea_colearn_forward.1} parent=0 // pred_check_branch
    %29 = sbr.rel (%p27) target = $region33
  $region32: #{clipikea_colearn_forward.1} parent=0 // pred_region
    %vm30 = vcmask 261120
    %31 = vst.msk [vmem:[#allocation2] sm:$0xff] %vm30, 0.0
    %32 = vst.msk [vmem:[#allocation2 + $0x8] sm:$0xff] %vm30, 0.0
    %33 = vst.msk [vmem:[#allocation2 + $0x10] sm:$0xff] %vm30, 0.0
  $region33: #{clipikea_colearn_forward.1} parent=0 // pred_fallthru
    _
  %v34 = vld [vmem:[%s2] sm:$0xff]
  %v35 = vld [vmem:[%s2 + $0x8] sm:$0xff]
  %v36 = vld [vmem:[%s2 + $0x10] sm:$0xff]
  %v37 = vld [vmem:[%s2 + $0x18] sm:$0xff]
  %v38 = vld [vmem:[%s2 + $0x20] sm:$0xff]
  %v39 = vld [vmem:[%s2 + $0x28] sm:$0xff]
  %v40 = vld [vmem:[%s2 + $0x30] sm:$0xff]
  %v41 = vld [vmem:[%s2 + $0x38] sm:$0xff]
  %v42 = vld [vmem:[%s2 + $0x40] sm:$0xff]
  %v43 = vld [vmem:[%s2 + $0x48] sm:$0xff]
  %v44 = vld [vmem:[%s2 + $0x50] sm:$0xff]
  %v45 = vld [vmem:[%s2 + $0x58] sm:$0xff]
  %v46 = vld [vmem:[%s2 + $0x60] sm:$0xff]
  %v47 = vld [vmem:[%s2 + $0x68] sm:$0xff]
  %v48 = vld [vmem:[%s2 + $0x70] sm:$0xff]
  %v49 = vld [vmem:[%s2 + $0x78] sm:$0xff]
  %v50 = vld [vmem:[%s2 + $0x80] sm:$0xff]
  %v51 = vld [vmem:[%s2 + $0x88] sm:$0xff]
  %v52 = vld [vmem:[%s2 + $0x90] sm:$0xff]
  %v53 = vld [vmem:[%s2 + $0x98] sm:$0xff]
  %v54 = vld [vmem:[%s2 + $0xa0] sm:$0xff]
  %v55 = vld [vmem:[%s2 + $0xa8] sm:$0xff]
  %v56 = vld [vmem:[%s2 + $0xb0] sm:$0xff]
  %v57 = vld [vmem:[%s2 + $0xb8] sm:$0xff]
  %v58 = vld [vmem:[%s2 + $0xc0] sm:$0xff]
  %v59 = vld [vmem:[%s2 + $0xc8] sm:$0xff]
  %v60 = vld [vmem:[%s2 + $0xd0] sm:$0xff]
  %v61 = vld [vmem:[%s2 + $0xd8] sm:$0xff]
  %v62 = vld [vmem:[%s2 + $0xe0] sm:$0xff]
  %v63 = vld [vmem:[%s2 + $0xe8] sm:$0xff]
  %v64 = vld [vmem:[%s2 + $0xf0] sm:$0xff]
  %v65 = vld [vmem:[%s2 + $0xf8] sm:$0xff]
  %v66 = vld [vmem:[%s2 + $0x100] sm:$0xff]
  %v67 = vld [vmem:[%s2 + $0x108] sm:$0xff]
  %v68 = vld [vmem:[%s2 + $0x110] sm:$0xff]
  %v69 = vld [vmem:[%s2 + $0x118] sm:$0xff]
  %v70 = vld [vmem:[%s2 + $0x120] sm:$0xff]
  %v71 = vld [vmem:[%s2 + $0x128] sm:$0xff]
  %v72 = vld [vmem:[%s2 + $0x130] sm:$0xff]
  %v73 = vld [vmem:[%s2 + $0x138] sm:$0xff]
  %v74 = vld [vmem:[%s2 + $0x140] sm:$0xff]
  %v75 = vld [vmem:[%s2 + $0x148] sm:$0xff]
  %v76 = vld [vmem:[%s2 + $0x150] sm:$0xff]
  %v77 = vld [vmem:[%s2 + $0x158] sm:$0xff]
  %v78 = vld [vmem:[%s2 + $0x160] sm:$0xff]
  %v79 = vld [vmem:[%s2 + $0x168] sm:$0xff]
  %v80 = vld [vmem:[%s2 + $0x170] sm:$0xff]
  %v81 = vld [vmem:[%s2 + $0x178] sm:$0xff]
  %v82 = vld [vmem:[%s2 + $0x180] sm:$0xff]
  %v83 = vld [vmem:[%s2 + $0x188] sm:$0xff]
  %v84 = vld [vmem:[%s2 + $0x190] sm:$0xff]
  %v85 = vld [vmem:[%s2 + $0x198] sm:$0xff]
  %v86 = vld [vmem:[%s2 + $0x1a0] sm:$0xff]
  %v87 = vld [vmem:[%s2 + $0x1a8] sm:$0xff]
  %v88 = vld [vmem:[%s2 + $0x1b0] sm:$0xff]
  %v89 = vld [vmem:[%s2 + $0x1b8] sm:$0xff]
  %v90 = vld [vmem:[%s2 + $0x1c0] sm:$0xff]
  %v91 = vld [vmem:[%s2 + $0x1c8] sm:$0xff]
  %v92 = vld [vmem:[%s2 + $0x1d0] sm:$0xff]
  %v93 = vld [vmem:[%s2 + $0x1d8] sm:$0xff]
  %v94 = vld [vmem:[%s2 + $0x1e0] sm:$0xff]
  %v95 = vld [vmem:[%s2 + $0x1e8] sm:$0xff]
  %v96 = vld [vmem:[%s2 + $0x1f0] sm:$0xff]
  %v97 = vld [vmem:[%s2 + $0x1f8] sm:$0xff]
  %v98 = vld [vmem:[%s2 + $0x200] sm:$0xff]
  %v99 = vld [vmem:[%s2 + $0x208] sm:$0xff]
  %v100 = vld [vmem:[%s2 + $0x210] sm:$0xff]
  %v101 = vld [vmem:[%s2 + $0x218] sm:$0xff]
  %v102 = vld [vmem:[%s2 + $0x220] sm:$0xff]
  %v103 = vld [vmem:[%s2 + $0x228] sm:$0xff]
  %v104 = vld [vmem:[%s2 + $0x230] sm:$0xff]
  %v105 = vld [vmem:[%s2 + $0x238] sm:$0xff]
  %v106 = vld [vmem:[%s2 + $0x240] sm:$0xff]
  %v107 = vld [vmem:[%s2 + $0x248] sm:$0xff]
  %v108 = vld [vmem:[%s2 + $0x250] sm:$0xff]
  %v109 = vld [vmem:[%s2 + $0x258] sm:$0xff]
  %v110 = vld [vmem:[%s2 + $0x260] sm:$0xff]
  %v111 = vld [vmem:[%s2 + $0x268] sm:$0xff]
  %v112 = vld [vmem:[%s2 + $0x270] sm:$0xff]
  %v113 = vld [vmem:[%s2 + $0x278] sm:$0xff]
  %v114 = vld [vmem:[%s2 + $0x280] sm:$0xff]
  %v115 = vld [vmem:[%s2 + $0x288] sm:$0xff]
  %v116 = vld [vmem:[%s2 + $0x290] sm:$0xff]
  %v117 = vld [vmem:[%s2 + $0x298] sm:$0xff]
  %v118 = vld [vmem:[%s2 + $0x2a0] sm:$0xff]
  %v119 = vld [vmem:[%s2 + $0x2a8] sm:$0xff]
  %v120 = vld [vmem:[%s2 + $0x2b0] sm:$0xff]
  %v121 = vld [vmem:[%s2 + $0x2b8] sm:$0xff]
  %v122 = vld [vmem:[%s2 + $0x2c0] sm:$0xff]
  %v123 = vld [vmem:[%s2 + $0x2c8] sm:$0xff]
  %v124 = vld [vmem:[%s2 + $0x2d0] sm:$0xff]
  %v125 = vld [vmem:[%s2 + $0x2d8] sm:$0xff]
  %v126 = vld [vmem:[%s2 + $0x2e0] sm:$0xff]
  %v127 = vld [vmem:[%s2 + $0x2e8] sm:$0xff]
  %v128 = vld [vmem:[%s2 + $0x2f0] sm:$0xff]
  %v129 = vld [vmem:[%s2 + $0x2f8] sm:$0xff]
  %v130 = vld [vmem:[%s2 + $0x300] sm:$0xff]
  %v131 = vld [vmem:[%s2 + $0x308] sm:$0xff]
  %v132 = vld [vmem:[%s2 + $0x310] sm:$0xff]
  %v133 = vld [vmem:[%s2 + $0x318] sm:$0xff]
  %v134 = vld [vmem:[%s2 + $0x320] sm:$0xff]
  %v135 = vld [vmem:[%s2 + $0x328] sm:$0xff]
  %v136 = vld [vmem:[%s2 + $0x330] sm:$0xff]
  %v137 = vld [vmem:[%s2 + $0x338] sm:$0xff]
  %v138 = vld [vmem:[%s2 + $0x340] sm:$0xff]
  %v139 = vld [vmem:[%s2 + $0x348] sm:$0xff]
  %v140 = vld [vmem:[%s2 + $0x350] sm:$0xff]
  %v141 = vld [vmem:[%s2 + $0x358] sm:$0xff]
  %v142 = vld [vmem:[%s2 + $0x360] sm:$0xff]
  %v143 = vld [vmem:[%s2 + $0x368] sm:$0xff]
  %v144 = vld [vmem:[%s2 + $0x370] sm:$0xff]
  %v145 = vld [vmem:[%s2 + $0x378] sm:$0xff]
  %v146 = vld [vmem:[%s2 + $0x380] sm:$0xff]
  %v147 = vld [vmem:[%s2 + $0x388] sm:$0xff]
  %v148 = vld [vmem:[%s2 + $0x390] sm:$0xff]
  %v149 = vld [vmem:[%s2 + $0x398] sm:$0xff]
  %v150 = vld [vmem:[%s2 + $0x3a0] sm:$0xff]
  %v151 = vld [vmem:[%s2 + $0x3a8] sm:$0xff]
  %v152 = vld [vmem:[%s2 + $0x3b0] sm:$0xff]
  %v153 = vld [vmem:[%s2 + $0x3b8] sm:$0xff]
  %v154 = vld [vmem:[%s2 + $0x3c0] sm:$0xff]
  %v155 = vld [vmem:[%s2 + $0x3c8] sm:$0xff]
  %v156 = vld [vmem:[%s2 + $0x3d0] sm:$0xff]
  %v157 = vld [vmem:[%s2 + $0x3d8] sm:$0xff]
  %v158 = vld [vmem:[%s2 + $0x3e0] sm:$0xff]
  %v159 = vld [vmem:[%s2 + $0x3e8] sm:$0xff]
  %v160 = vld [vmem:[%s2 + $0x3f0] sm:$0xff]
  %v161 = vld [vmem:[%s2 + $0x3f8] sm:$0xff]
  %v162 = vld [vmem:[#allocation2] sm:$0xff]
  %v163 = vld [vmem:[%s1] sm:$0xff]
  %v164 = vld [vmem:[%s1 + $0x8] sm:$0xff]
  %v165 = vld [vmem:[%s1 + $0x10] sm:$0xff]
  %v166 = vld [vmem:[%s1 + $0x18] sm:$0xff]
  %v167 = vld [vmem:[%s1 + $0x20] sm:$0xff]
  %v168 = vld [vmem:[%s1 + $0x28] sm:$0xff]
  %v169 = vld [vmem:[%s1 + $0x30] sm:$0xff]
  %v170 = vld [vmem:[%s1 + $0x38] sm:$0xff]
  %171 = vmatpush.msra.mxu0 %v49
  %172 = vmatpush.msra.mxu0 %v48
  %173 = vmatpush.msra.mxu0 %v47
  %174 = vmatpush.msra.mxu0 %v46
  %175 = vmatpush.msra.mxu0 %v45
  %176 = vmatpush.msra.mxu0 %v44
  %177 = vmatpush.msra.mxu0 %v43
  %178 = vmatpush.msra.mxu0 %v42
  %179 = vmatpush.msra.mxu0 %v41
  %180 = vmatpush.msra.mxu0 %v40
  %181 = vmatpush.msra.mxu0 %v39
  %182 = vmatpush.msra.mxu0 %v38
  %183 = vmatpush.msra.mxu0 %v37
  %184 = vmatpush.msra.mxu0 %v36
  %185 = vmatpush.msra.mxu0 %v35
  %186 = vmatpush.msra.mxu0 %v34
  %187 = vmatmul.f32.gmra.mxu0 %v163
  %v188 = vpop.f32.mrf.mxu0
  %v189 = vadd.f32 0.0, %v188
  %190 = vdwg.mxu0
  %191 = vmatpush.msra.mxu0 %v65
  %192 = vmatpush.msra.mxu0 %v64
  %193 = vmatpush.msra.mxu0 %v63
  %194 = vmatpush.msra.mxu0 %v62
  %195 = vmatpush.msra.mxu0 %v61
  %196 = vmatpush.msra.mxu0 %v60
  %197 = vmatpush.msra.mxu0 %v59
  %198 = vmatpush.msra.mxu0 %v58
  %199 = vmatpush.msra.mxu0 %v57
  %200 = vmatpush.msra.mxu0 %v56
  %201 = vmatpush.msra.mxu0 %v55
  %202 = vmatpush.msra.mxu0 %v54
  %203 = vmatpush.msra.mxu0 %v53
  %204 = vmatpush.msra.mxu0 %v52
  %205 = vmatpush.msra.mxu0 %v51
  %206 = vmatpush.msra.mxu0 %v50
  %207 = vmatmul.f32.gmra.mxu0 %v164
  %v208 = vpop.f32.mrf.mxu0
  %v209 = vadd.f32 %v189, %v208
  %210 = vdwg.mxu0
  %211 = vmatpush.msra.mxu0 %v81
  %212 = vmatpush.msra.mxu0 %v80
  %213 = vmatpush.msra.mxu0 %v79
  %214 = vmatpush.msra.mxu0 %v78
  %215 = vmatpush.msra.mxu0 %v77
  %216 = vmatpush.msra.mxu0 %v76
  %217 = vmatpush.msra.mxu0 %v75
  %218 = vmatpush.msra.mxu0 %v74
  %219 = vmatpush.msra.mxu0 %v73
  %220 = vmatpush.msra.mxu0 %v72
  %221 = vmatpush.msra.mxu0 %v71
  %222 = vmatpush.msra.mxu0 %v70
  %223 = vmatpush.msra.mxu0 %v69
  %224 = vmatpush.msra.mxu0 %v68
  %225 = vmatpush.msra.mxu0 %v67
  %226 = vmatpush.msra.mxu0 %v66
  %227 = vmatmul.f32.gmra.mxu0 %v165
  %v228 = vpop.f32.mrf.mxu0
  %v229 = vadd.f32 %v209, %v228
  %230 = vdwg.mxu0
  %231 = vmatpush.msra.mxu0 %v97
  %232 = vmatpush.msra.mxu0 %v96
  %233 = vmatpush.msra.mxu0 %v95
  %234 = vmatpush.msra.mxu0 %v94
  %235 = vmatpush.msra.mxu0 %v93
  %236 = vmatpush.msra.mxu0 %v92
  %237 = vmatpush.msra.mxu0 %v91
  %238 = vmatpush.msra.mxu0 %v90
  %239 = vmatpush.msra.mxu0 %v89
  %240 = vmatpush.msra.mxu0 %v88
  %241 = vmatpush.msra.mxu0 %v87
  %242 = vmatpush.msra.mxu0 %v86
  %243 = vmatpush.msra.mxu0 %v85
  %244 = vmatpush.msra.mxu0 %v84
  %245 = vmatpush.msra.mxu0 %v83
  %246 = vmatpush.msra.mxu0 %v82
  %247 = vmatmul.f32.gmra.mxu0 %v166
  %v248 = vpop.f32.mrf.mxu0
  %v249 = vadd.f32 %v229, %v248
  %250 = vdwg.mxu0
  %251 = vmatpush.msra.mxu0 %v113
  %252 = vmatpush.msra.mxu0 %v112
  %253 = vmatpush.msra.mxu0 %v111
  %254 = vmatpush.msra.mxu0 %v110
  %255 = vmatpush.msra.mxu0 %v109
  %256 = vmatpush.msra.mxu0 %v108
  %257 = vmatpush.msra.mxu0 %v107
  %258 = vmatpush.msra.mxu0 %v106
  %259 = vmatpush.msra.mxu0 %v105
  %260 = vmatpush.msra.mxu0 %v104
  %261 = vmatpush.msra.mxu0 %v103
  %262 = vmatpush.msra.mxu0 %v102
  %263 = vmatpush.msra.mxu0 %v101
  %264 = vmatpush.msra.mxu0 %v100
  %265 = vmatpush.msra.mxu0 %v99
  %266 = vmatpush.msra.mxu0 %v98
  %267 = vmatmul.f32.gmra.mxu0 %v167
  %v268 = vpop.f32.mrf.mxu0
  %v269 = vadd.f32 %v249, %v268
  %270 = vdwg.mxu0
  %271 = vmatpush.msra.mxu0 %v129
  %272 = vmatpush.msra.mxu0 %v128
  %273 = vmatpush.msra.mxu0 %v127
  %274 = vmatpush.msra.mxu0 %v126
  %275 = vmatpush.msra.mxu0 %v125
  %276 = vmatpush.msra.mxu0 %v124
  %277 = vmatpush.msra.mxu0 %v123
  %278 = vmatpush.msra.mxu0 %v122
  %279 = vmatpush.msra.mxu0 %v121
  %280 = vmatpush.msra.mxu0 %v120
  %281 = vmatpush.msra.mxu0 %v119
  %282 = vmatpush.msra.mxu0 %v118
  %283 = vmatpush.msra.mxu0 %v117
  %284 = vmatpush.msra.mxu0 %v116
  %285 = vmatpush.msra.mxu0 %v115
  %286 = vmatpush.msra.mxu0 %v114
  %287 = vmatmul.f32.gmra.mxu0 %v168
  %v288 = vpop.f32.mrf.mxu0
  %v289 = vadd.f32 %v269, %v288
  %290 = vdwg.mxu0
  %291 = vmatpush.msra.mxu0 %v145
  %292 = vmatpush.msra.mxu0 %v144
  %293 = vmatpush.msra.mxu0 %v143
  %294 = vmatpush.msra.mxu0 %v142
  %295 = vmatpush.msra.mxu0 %v141
  %296 = vmatpush.msra.mxu0 %v140
  %297 = vmatpush.msra.mxu0 %v139
  %298 = vmatpush.msra.mxu0 %v138
  %299 = vmatpush.msra.mxu0 %v137
  %300 = vmatpush.msra.mxu0 %v136
  %301 = vmatpush.msra.mxu0 %v135
  %302 = vmatpush.msra.mxu0 %v134
  %303 = vmatpush.msra.mxu0 %v133
  %304 = vmatpush.msra.mxu0 %v132
  %305 = vmatpush.msra.mxu0 %v131
  %306 = vmatpush.msra.mxu0 %v130
  %307 = vmatmul.f32.gmra.mxu0 %v169
  %v308 = vpop.f32.mrf.mxu0
  %v309 = vadd.f32 %v289, %v308
  %310 = vdwg.mxu0
  %311 = vmatpush.msra.mxu0 %v161
  %312 = vmatpush.msra.mxu0 %v160
  %313 = vmatpush.msra.mxu0 %v159
  %314 = vmatpush.msra.mxu0 %v158
  %315 = vmatpush.msra.mxu0 %v157
  %316 = vmatpush.msra.mxu0 %v156
  %317 = vmatpush.msra.mxu0 %v155
  %318 = vmatpush.msra.mxu0 %v154
  %319 = vmatpush.msra.mxu0 %v153
  %320 = vmatpush.msra.mxu0 %v152
  %321 = vmatpush.msra.mxu0 %v151
  %322 = vmatpush.msra.mxu0 %v150
  %323 = vmatpush.msra.mxu0 %v149
  %324 = vmatpush.msra.mxu0 %v148
  %325 = vmatpush.msra.mxu0 %v147
  %326 = vmatpush.msra.mxu0 %v146
  %327 = vmatmul.f32.gmra.mxu0 %v170
  %v328 = vpop.f32.mrf.mxu0
  %v329 = vadd.f32 %v309, %v328
  %330 = vdwg.mxu0
  %v331 = vadd.f32 %v162, %v329
  %vm332 = vcmask 261120
  %333 = vst.msk [vmem:[#allocation2] sm:$0xff] %vm332, %v331
  %s334 = scalar_lea.vmem [#allocation2], 8
  %v335 = vld [vmem:[%s334] sm:$0xff]
  %s336 = scalar_lea.vmem %s1, 64
  %v337 = vld [vmem:[%s336] sm:$0xff]
  %v338 = vld [vmem:[%s336 + $0x8] sm:$0xff]
  %v339 = vld [vmem:[%s336 + $0x10] sm:$0xff]
  %v340 = vld [vmem:[%s336 + $0x18] sm:$0xff]
  %v341 = vld [vmem:[%s336 + $0x20] sm:$0xff]
  %v342 = vld [vmem:[%s336 + $0x28] sm:$0xff]
  %v343 = vld [vmem:[%s336 + $0x30] sm:$0xff]
  %v344 = vld [vmem:[%s336 + $0x38] sm:$0xff]
  %345 = vmatpush.msra.mxu0 %v49
  %346 = vmatpush.msra.mxu0 %v48
  %347 = vmatpush.msra.mxu0 %v47
  %348 = vmatpush.msra.mxu0 %v46
  %349 = vmatpush.msra.mxu0 %v45
  %350 = vmatpush.msra.mxu0 %v44
  %351 = vmatpush.msra.mxu0 %v43
  %352 = vmatpush.msra.mxu0 %v42
  %353 = vmatpush.msra.mxu0 %v41
  %354 = vmatpush.msra.mxu0 %v40
  %355 = vmatpush.msra.mxu0 %v39
  %356 = vmatpush.msra.mxu0 %v38
  %357 = vmatpush.msra.mxu0 %v37
  %358 = vmatpush.msra.mxu0 %v36
  %359 = vmatpush.msra.mxu0 %v35
  %360 = vmatpush.msra.mxu0 %v34
  %361 = vmatmul.f32.gmra.mxu0 %v337
  %v362 = vpop.f32.mrf.mxu0
  %v363 = vadd.f32 0.0, %v362
  %364 = vdwg.mxu0
  %365 = vmatpush.msra.mxu0 %v65
  %366 = vmatpush.msra.mxu0 %v64
  %367 = vmatpush.msra.mxu0 %v63
  %368 = vmatpush.msra.mxu0 %v62
  %369 = vmatpush.msra.mxu0 %v61
  %370 = vmatpush.msra.mxu0 %v60
  %371 = vmatpush.msra.mxu0 %v59
  %372 = vmatpush.msra.mxu0 %v58
  %373 = vmatpush.msra.mxu0 %v57
  %374 = vmatpush.msra.mxu0 %v56
  %375 = vmatpush.msra.mxu0 %v55
  %376 = vmatpush.msra.mxu0 %v54
  %377 = vmatpush.msra.mxu0 %v53
  %378 = vmatpush.msra.mxu0 %v52
  %379 = vmatpush.msra.mxu0 %v51
  %380 = vmatpush.msra.mxu0 %v50
  %381 = vmatmul.f32.gmra.mxu0 %v338
  %v382 = vpop.f32.mrf.mxu0
  %v383 = vadd.f32 %v363, %v382
  %384 = vdwg.mxu0
  %385 = vmatpush.msra.mxu0 %v81
  %386 = vmatpush.msra.mxu0 %v80
  %387 = vmatpush.msra.mxu0 %v79
  %388 = vmatpush.msra.mxu0 %v78
  %389 = vmatpush.msra.mxu0 %v77
  %390 = vmatpush.msra.mxu0 %v76
  %391 = vmatpush.msra.mxu0 %v75
  %392 = vmatpush.msra.mxu0 %v74
  %393 = vmatpush.msra.mxu0 %v73
  %394 = vmatpush.msra.mxu0 %v72
  %395 = vmatpush.msra.mxu0 %v71
  %396 = vmatpush.msra.mxu0 %v70
  %397 = vmatpush.msra.mxu0 %v69
  %398 = vmatpush.msra.mxu0 %v68
  %399 = vmatpush.msra.mxu0 %v67
  %400 = vmatpush.msra.mxu0 %v66
  %401 = vmatmul.f32.gmra.mxu0 %v339
  %v402 = vpop.f32.mrf.mxu0
  %v403 = vadd.f32 %v383, %v402
  %404 = vdwg.mxu0
  %405 = vmatpush.msra.mxu0 %v97
  %406 = vmatpush.msra.mxu0 %v96
  %407 = vmatpush.msra.mxu0 %v95
  %408 = vmatpush.msra.mxu0 %v94
  %409 = vmatpush.msra.mxu0 %v93
  %410 = vmatpush.msra.mxu0 %v92
  %411 = vmatpush.msra.mxu0 %v91
  %412 = vmatpush.msra.mxu0 %v90
  %413 = vmatpush.msra.mxu0 %v89
  %414 = vmatpush.msra.mxu0 %v88
  %415 = vmatpush.msra.mxu0 %v87
  %416 = vmatpush.msra.mxu0 %v86
  %417 = vmatpush.msra.mxu0 %v85
  %418 = vmatpush.msra.mxu0 %v84
  %419 = vmatpush.msra.mxu0 %v83
  %420 = vmatpush.msra.mxu0 %v82
  %421 = vmatmul.f32.gmra.mxu0 %v340
  %v422 = vpop.f32.mrf.mxu0
  %v423 = vadd.f32 %v403, %v422
  %424 = vdwg.mxu0
  %425 = vmatpush.msra.mxu0 %v113
  %426 = vmatpush.msra.mxu0 %v112
  %427 = vmatpush.msra.mxu0 %v111
  %428 = vmatpush.msra.mxu0 %v110
  %429 = vmatpush.msra.mxu0 %v109
  %430 = vmatpush.msra.mxu0 %v108
  %431 = vmatpush.msra.mxu0 %v107
  %432 = vmatpush.msra.mxu0 %v106
  %433 = vmatpush.msra.mxu0 %v105
  %434 = vmatpush.msra.mxu0 %v104
  %435 = vmatpush.msra.mxu0 %v103
  %436 = vmatpush.msra.mxu0 %v102
  %437 = vmatpush.msra.mxu0 %v101
  %438 = vmatpush.msra.mxu0 %v100
  %439 = vmatpush.msra.mxu0 %v99
  %440 = vmatpush.msra.mxu0 %v98
  %441 = vmatmul.f32.gmra.mxu0 %v341
  %v442 = vpop.f32.mrf.mxu0
  %v443 = vadd.f32 %v423, %v442
  %444 = vdwg.mxu0
  %445 = vmatpush.msra.mxu0 %v129
  %446 = vmatpush.msra.mxu0 %v128
  %447 = vmatpush.msra.mxu0 %v127
  %448 = vmatpush.msra.mxu0 %v126
  %449 = vmatpush.msra.mxu0 %v125
  %450 = vmatpush.msra.mxu0 %v124
  %451 = vmatpush.msra.mxu0 %v123
  %452 = vmatpush.msra.mxu0 %v122
  %453 = vmatpush.msra.mxu0 %v121
  %454 = vmatpush.msra.mxu0 %v120
  %455 = vmatpush.msra.mxu0 %v119
  %456 = vmatpush.msra.mxu0 %v118
  %457 = vmatpush.msra.mxu0 %v117
  %458 = vmatpush.msra.mxu0 %v116
  %459 = vmatpush.msra.mxu0 %v115
  %460 = vmatpush.msra.mxu0 %v114
  %461 = vmatmul.f32.gmra.mxu0 %v342
  %v462 = vpop.f32.mrf.mxu0
  %v463 = vadd.f32 %v443, %v462
  %464 = vdwg.mxu0
  %465 = vmatpush.msra.mxu0 %v145
  %466 = vmatpush.msra.mxu0 %v144
  %467 = vmatpush.msra.mxu0 %v143
  %468 = vmatpush.msra.mxu0 %v142
  %469 = vmatpush.msra.mxu0 %v141
  %470 = vmatpush.msra.mxu0 %v140
  %471 = vmatpush.msra.mxu0 %v139
  %472 = vmatpush.msra.mxu0 %v138
  %473 = vmatpush.msra.mxu0 %v137
  %474 = vmatpush.msra.mxu0 %v136
  %475 = vmatpush.msra.mxu0 %v135
  %476 = vmatpush.msra.mxu0 %v134
  %477 = vmatpush.msra.mxu0 %v133
  %478 = vmatpush.msra.mxu0 %v132
  %479 = vmatpush.msra.mxu0 %v131
  %480 = vmatpush.msra.mxu0 %v130
  %481 = vmatmul.f32.gmra.mxu0 %v343
  %v482 = vpop.f32.mrf.mxu0
  %v483 = vadd.f32 %v463, %v482
  %484 = vdwg.mxu0
  %485 = vmatpush.msra.mxu0 %v161
  %486 = vmatpush.msra.mxu0 %v160
  %487 = vmatpush.msra.mxu0 %v159
  %488 = vmatpush.msra.mxu0 %v158
  %489 = vmatpush.msra.mxu0 %v157
  %490 = vmatpush.msra.mxu0 %v156
  %491 = vmatpush.msra.mxu0 %v155
  %492 = vmatpush.msra.mxu0 %v154
  %493 = vmatpush.msra.mxu0 %v153
  %494 = vmatpush.msra.mxu0 %v152
  %495 = vmatpush.msra.mxu0 %v151
  %496 = vmatpush.msra.mxu0 %v150
  %497 = vmatpush.msra.mxu0 %v149
  %498 = vmatpush.msra.mxu0 %v148
  %499 = vmatpush.msra.mxu0 %v147
  %500 = vmatpush.msra.mxu0 %v146
  %501 = vmatmul.f32.gmra.mxu0 %v344
  %v502 = vpop.f32.mrf.mxu0
  %v503 = vadd.f32 %v483, %v502
  %504 = vdwg.mxu0
  %v505 = vadd.f32 %v335, %v503
  %506 = vst.msk [vmem:[%s334] sm:$0xff] %vm332, %v505
  %s507 = scalar_lea.vmem [#allocation2], 16
  %v508 = vld [vmem:[%s507] sm:$0xff]
  %s509 = scalar_lea.vmem %s1, 128
  %v510 = vld [vmem:[%s509] sm:$0xff]
  %v511 = vld [vmem:[%s509 + $0x8] sm:$0xff]
  %v512 = vld [vmem:[%s509 + $0x10] sm:$0xff]
  %v513 = vld [vmem:[%s509 + $0x18] sm:$0xff]
  %v514 = vld [vmem:[%s509 + $0x20] sm:$0xff]
  %v515 = vld [vmem:[%s509 + $0x28] sm:$0xff]
  %v516 = vld [vmem:[%s509 + $0x30] sm:$0xff]
  %v517 = vld [vmem:[%s509 + $0x38] sm:$0xff]
  %518 = vmatpush.msra.mxu0 %v49
  %519 = vmatpush.msra.mxu0 %v48
  %520 = vmatpush.msra.mxu0 %v47
  %521 = vmatpush.msra.mxu0 %v46
  %522 = vmatpush.msra.mxu0 %v45
  %523 = vmatpush.msra.mxu0 %v44
  %524 = vmatpush.msra.mxu0 %v43
  %525 = vmatpush.msra.mxu0 %v42
  %526 = vmatpush.msra.mxu0 %v41
  %527 = vmatpush.msra.mxu0 %v40
  %528 = vmatpush.msra.mxu0 %v39
  %529 = vmatpush.msra.mxu0 %v38
  %530 = vmatpush.msra.mxu0 %v37
  %531 = vmatpush.msra.mxu0 %v36
  %532 = vmatpush.msra.mxu0 %v35
  %533 = vmatpush.msra.mxu0 %v34
  %534 = vmatmul.f32.gmra.mxu0 %v510
  %v535 = vpop.f32.mrf.mxu0
  %v536 = vadd.f32 0.0, %v535
  %537 = vdwg.mxu0
  %538 = vmatpush.msra.mxu0 %v65
  %539 = vmatpush.msra.mxu0 %v64
  %540 = vmatpush.msra.mxu0 %v63
  %541 = vmatpush.msra.mxu0 %v62
  %542 = vmatpush.msra.mxu0 %v61
  %543 = vmatpush.msra.mxu0 %v60
  %544 = vmatpush.msra.mxu0 %v59
  %545 = vmatpush.msra.mxu0 %v58
  %546 = vmatpush.msra.mxu0 %v57
  %547 = vmatpush.msra.mxu0 %v56
  %548 = vmatpush.msra.mxu0 %v55
  %549 = vmatpush.msra.mxu0 %v54
  %550 = vmatpush.msra.mxu0 %v53
  %551 = vmatpush.msra.mxu0 %v52
  %552 = vmatpush.msra.mxu0 %v51
  %553 = vmatpush.msra.mxu0 %v50
  %554 = vmatmul.f32.gmra.mxu0 %v511
  %v555 = vpop.f32.mrf.mxu0
  %v556 = vadd.f32 %v536, %v555
  %557 = vdwg.mxu0
  %558 = vmatpush.msra.mxu0 %v81
  %559 = vmatpush.msra.mxu0 %v80
  %560 = vmatpush.msra.mxu0 %v79
  %561 = vmatpush.msra.mxu0 %v78
  %562 = vmatpush.msra.mxu0 %v77
  %563 = vmatpush.msra.mxu0 %v76
  %564 = vmatpush.msra.mxu0 %v75
  %565 = vmatpush.msra.mxu0 %v74
  %566 = vmatpush.msra.mxu0 %v73
  %567 = vmatpush.msra.mxu0 %v72
  %568 = vmatpush.msra.mxu0 %v71
  %569 = vmatpush.msra.mxu0 %v70
  %570 = vmatpush.msra.mxu0 %v69
  %571 = vmatpush.msra.mxu0 %v68
  %572 = vmatpush.msra.mxu0 %v67
  %573 = vmatpush.msra.mxu0 %v66
  %574 = vmatmul.f32.gmra.mxu0 %v512
  %v575 = vpop.f32.mrf.mxu0
  %v576 = vadd.f32 %v556, %v575
  %577 = vdwg.mxu0
  %578 = vmatpush.msra.mxu0 %v97
  %579 = vmatpush.msra.mxu0 %v96
  %580 = vmatpush.msra.mxu0 %v95
  %581 = vmatpush.msra.mxu0 %v94
  %582 = vmatpush.msra.mxu0 %v93
  %583 = vmatpush.msra.mxu0 %v92
  %584 = vmatpush.msra.mxu0 %v91
  %585 = vmatpush.msra.mxu0 %v90
  %586 = vmatpush.msra.mxu0 %v89
  %587 = vmatpush.msra.mxu0 %v88
  %588 = vmatpush.msra.mxu0 %v87
  %589 = vmatpush.msra.mxu0 %v86
  %590 = vmatpush.msra.mxu0 %v85
  %591 = vmatpush.msra.mxu0 %v84
  %592 = vmatpush.msra.mxu0 %v83
  %593 = vmatpush.msra.mxu0 %v82
  %594 = vmatmul.f32.gmra.mxu0 %v513
  %v595 = vpop.f32.mrf.mxu0
  %v596 = vadd.f32 %v576, %v595
  %597 = vdwg.mxu0
  %598 = vmatpush.msra.mxu0 %v113
  %599 = vmatpush.msra.mxu0 %v112
  %600 = vmatpush.msra.mxu0 %v111
  %601 = vmatpush.msra.mxu0 %v110
  %602 = vmatpush.msra.mxu0 %v109
  %603 = vmatpush.msra.mxu0 %v108
  %604 = vmatpush.msra.mxu0 %v107
  %605 = vmatpush.msra.mxu0 %v106
  %606 = vmatpush.msra.mxu0 %v105
  %607 = vmatpush.msra.mxu0 %v104
  %608 = vmatpush.msra.mxu0 %v103
  %609 = vmatpush.msra.mxu0 %v102
  %610 = vmatpush.msra.mxu0 %v101
  %611 = vmatpush.msra.mxu0 %v100
  %612 = vmatpush.msra.mxu0 %v99
  %613 = vmatpush.msra.mxu0 %v98
  %614 = vmatmul.f32.gmra.mxu0 %v514
  %v615 = vpop.f32.mrf.mxu0
  %v616 = vadd.f32 %v596, %v615
  %617 = vdwg.mxu0
  %618 = vmatpush.msra.mxu0 %v129
  %619 = vmatpush.msra.mxu0 %v128
  %620 = vmatpush.msra.mxu0 %v127
  %621 = vmatpush.msra.mxu0 %v126
  %622 = vmatpush.msra.mxu0 %v125
  %623 = vmatpush.msra.mxu0 %v124
  %624 = vmatpush.msra.mxu0 %v123
  %625 = vmatpush.msra.mxu0 %v122
  %626 = vmatpush.msra.mxu0 %v121
  %627 = vmatpush.msra.mxu0 %v120
  %628 = vmatpush.msra.mxu0 %v119
  %629 = vmatpush.msra.mxu0 %v118
  %630 = vmatpush.msra.mxu0 %v117
  %631 = vmatpush.msra.mxu0 %v116
  %632 = vmatpush.msra.mxu0 %v115
  %633 = vmatpush.msra.mxu0 %v114
  %634 = vmatmul.f32.gmra.mxu0 %v515
  %v635 = vpop.f32.mrf.mxu0
  %v636 = vadd.f32 %v616, %v635
  %637 = vdwg.mxu0
  %638 = vmatpush.msra.mxu0 %v145
  %639 = vmatpush.msra.mxu0 %v144
  %640 = vmatpush.msra.mxu0 %v143
  %641 = vmatpush.msra.mxu0 %v142
  %642 = vmatpush.msra.mxu0 %v141
  %643 = vmatpush.msra.mxu0 %v140
  %644 = vmatpush.msra.mxu0 %v139
  %645 = vmatpush.msra.mxu0 %v138
  %646 = vmatpush.msra.mxu0 %v137
  %647 = vmatpush.msra.mxu0 %v136
  %648 = vmatpush.msra.mxu0 %v135
  %649 = vmatpush.msra.mxu0 %v134
  %650 = vmatpush.msra.mxu0 %v133
  %651 = vmatpush.msra.mxu0 %v132
  %652 = vmatpush.msra.mxu0 %v131
  %653 = vmatpush.msra.mxu0 %v130
  %654 = vmatmul.f32.gmra.mxu0 %v516
  %v655 = vpop.f32.mrf.mxu0
  %v656 = vadd.f32 %v636, %v655
  %657 = vdwg.mxu0
  %658 = vmatpush.msra.mxu0 %v161
  %659 = vmatpush.msra.mxu0 %v160
  %660 = vmatpush.msra.mxu0 %v159
  %661 = vmatpush.msra.mxu0 %v158
  %662 = vmatpush.msra.mxu0 %v157
  %663 = vmatpush.msra.mxu0 %v156
  %664 = vmatpush.msra.mxu0 %v155
  %665 = vmatpush.msra.mxu0 %v154
  %666 = vmatpush.msra.mxu0 %v153
  %667 = vmatpush.msra.mxu0 %v152
  %668 = vmatpush.msra.mxu0 %v151
  %669 = vmatpush.msra.mxu0 %v150
  %670 = vmatpush.msra.mxu0 %v149
  %671 = vmatpush.msra.mxu0 %v148
  %672 = vmatpush.msra.mxu0 %v147
  %673 = vmatpush.msra.mxu0 %v146
  %674 = vmatmul.f32.gmra.mxu0 %v517
  %v675 = vpop.f32.mrf.mxu0
  %v676 = vadd.f32 %v656, %v675
  %677 = vdwg.mxu0
  %v678 = vadd.f32 %v508, %v676
  %679 = vst.msk [vmem:[%s507] sm:$0xff] %vm332, %v678
  // Predicated region
  $region34: #{clipikea_colearn_forward.1} parent=0 // pred_check
    %p680 = pneg %p26
  $region35: #{clipikea_colearn_forward.1} parent=0 // pred_check_branch
    %682 = sbr.rel (%p680) target = $region37
  $region36: #{clipikea_colearn_forward.1} parent=0 // pred_region
    %v683 = vld [vmem:[%s0] sm:$0xff]
    %vm684 = vcmask 523264
    %685 = vst.msk [vmem:[#allocation3] sm:$0xff] %vm684, %v683
    %v686 = vld [vmem:[#allocation2] sm:$0xff]
    %688 = vrot.lane.b32.xlu0 %v686, 64
    %v689 = vpop.permute.xlu0 %688
    %vm691 = vcmask 785920
    %692 = vst.msk [vmem:[#allocation3] sm:$0xff] %vm691, %v689
    %v693 = vld [vmem:[%s334] sm:$0xff]
    %695 = vrot.lane.b32.xlu0 %v693, 96
    %v696 = vpop.permute.xlu0 %695
    %vm698 = vcmask 1048320
    %699 = vst.msk [vmem:[#allocation3] sm:$0xff] %vm698, %v696
    %v700 = vld [vmem:[%s507] sm:$0xff]
    %701 = vst.msk [vmem:[#allocation3 + $0x8] sm:$0xff] %vm332, %v700
    %v702 = vld [vmem:[#allocation3] sm:$0xff]
    %v703 = vld [vmem:[#allocation3 + $0x8] sm:$0xff]
    %v704 = vld [vmem:[%s3] sm:$0xff]
    %v705 = vld [vmem:[%s3 + $0x8] sm:$0xff]
    %v706 = vld [vmem:[%s3 + $0x10] sm:$0xff]
    %v707 = vld [vmem:[%s3 + $0x18] sm:$0xff]
    %v708 = vld [vmem:[%s3 + $0x20] sm:$0xff]
    %v709 = vld [vmem:[%s3 + $0x28] sm:$0xff]
    %v710 = vld [vmem:[%s3 + $0x30] sm:$0xff]
    %v711 = vld [vmem:[%s3 + $0x38] sm:$0xff]
    %v712 = vld [vmem:[%s3 + $0x40] sm:$0xff]
    %v713 = vld [vmem:[%s3 + $0x48] sm:$0xff]
    %v714 = vld [vmem:[%s3 + $0x50] sm:$0xff]
    %v715 = vld [vmem:[%s3 + $0x58] sm:$0xff]
    %v716 = vld [vmem:[%s3 + $0x60] sm:$0xff]
    %v717 = vld [vmem:[%s3 + $0x68] sm:$0xff]
    %v718 = vld [vmem:[%s3 + $0x70] sm:$0xff]
    %v719 = vld [vmem:[%s3 + $0x78] sm:$0xff]
    %v720 = vld [vmem:[%s3 + $0x80] sm:$0xff]
    %v721 = vld [vmem:[%s3 + $0x88] sm:$0xff]
    %v722 = vld [vmem:[%s3 + $0x90] sm:$0xff]
    %v723 = vld [vmem:[%s3 + $0x98] sm:$0xff]
    %v724 = vld [vmem:[%s3 + $0xa0] sm:$0xff]
    %v725 = vld [vmem:[%s3 + $0xa8] sm:$0xff]
    %v726 = vld [vmem:[%s3 + $0xb0] sm:$0xff]
    %v727 = vld [vmem:[%s3 + $0xb8] sm:$0xff]
    %v728 = vld [vmem:[%s3 + $0xc0] sm:$0xff]
    %v729 = vld [vmem:[%s3 + $0xc8] sm:$0xff]
    %v730 = vld [vmem:[%s3 + $0xd0] sm:$0xff]
    %v731 = vld [vmem:[%s3 + $0xd8] sm:$0xff]
    %v732 = vld [vmem:[%s3 + $0xe0] sm:$0xff]
    %v733 = vld [vmem:[%s3 + $0xe8] sm:$0xff]
    %v734 = vld [vmem:[%s3 + $0xf0] sm:$0xff]
    %v735 = vld [vmem:[%s3 + $0xf8] sm:$0xff]
    %v736 = vld [vmem:[%s3 + $0x100] sm:$0xff]
    %v737 = vld [vmem:[%s3 + $0x108] sm:$0xff]
    %v738 = vld [vmem:[%s3 + $0x110] sm:$0xff]
    %v739 = vld [vmem:[%s3 + $0x118] sm:$0xff]
    %v740 = vld [vmem:[%s3 + $0x120] sm:$0xff]
    %v741 = vld [vmem:[%s3 + $0x128] sm:$0xff]
    %v742 = vld [vmem:[%s3 + $0x130] sm:$0xff]
    %v743 = vld [vmem:[%s3 + $0x138] sm:$0xff]
    %v744 = vld [vmem:[%s4] sm:$0x3]
    %v746 = vperm.slane %v744, 0
    %v747 = vperm.slane %v744, 1
    %v751 = vsel %vm332, %v703, 0
    %753 = vmatpush.msra.mxu0 %v734
    %754 = vmatpush.msra.mxu0 %v732
    %755 = vmatpush.msra.mxu0 %v730
    %756 = vmatpush.msra.mxu0 %v728
    %757 = vmatpush.msra.mxu0 %v726
    %758 = vmatpush.msra.mxu0 %v724
    %759 = vmatpush.msra.mxu0 %v722
    %760 = vmatpush.msra.mxu0 %v720
    %761 = vmatpush.msra.mxu0 %v718
    %762 = vmatpush.msra.mxu0 %v716
    %763 = vmatpush.msra.mxu0 %v714
    %764 = vmatpush.msra.mxu0 %v712
    %765 = vmatpush.msra.mxu0 %v710
    %766 = vmatpush.msra.mxu0 %v708
    %767 = vmatpush.msra.mxu0 %v706
    %768 = vmatpush.msra.mxu0 %v704
    %769 = vmatmul.f32.gmra.mxu0 %v702
    %v770 = vpop.f32.mrf.mxu0
    %v771 = vadd.f32 %v746, %v770
    %772 = vdwg.mxu0
    %773 = vmatpush.msra.mxu0 0.0
    %774 = vmatpush.msra.mxu0 0.0
    %775 = vmatpush.msra.mxu0 0.0
    %776 = vmatpush.msra.mxu0 0.0
    %777 = vmatpush.msra.mxu0 0.0
    %778 = vmatpush.msra.mxu0 0.0
    %779 = vmatpush.msra.mxu0 0.0
    %780 = vmatpush.msra.mxu0 0.0
    %781 = vmatpush.msra.mxu0 0.0
    %782 = vmatpush.msra.mxu0 0.0
    %783 = vmatpush.msra.mxu0 0.0
    %784 = vmatpush.msra.mxu0 0.0
    %785 = vmatpush.msra.mxu0 %v742
    %786 = vmatpush.msra.mxu0 %v740
    %787 = vmatpush.msra.mxu0 %v738
    %788 = vmatpush.msra.mxu0 %v736
    %789 = vmatmul.f32.gmra.mxu0 %v751
    %v790 = vpop.f32.mrf.mxu0
    %v791 = vadd.f32 %v771, %v790
    %792 = vdwg.mxu0
    %793 = vmatpush.msra.mxu0 %v735
    %794 = vmatpush.msra.mxu0 %v733
    %795 = vmatpush.msra.mxu0 %v731
    %796 = vmatpush.msra.mxu0 %v729
    %797 = vmatpush.msra.mxu0 %v727
    %798 = vmatpush.msra.mxu0 %v725
    %799 = vmatpush.msra.mxu0 %v723
    %800 = vmatpush.msra.mxu0 %v721
    %801 = vmatpush.msra.mxu0 %v719
    %802 = vmatpush.msra.mxu0 %v717
    %803 = vmatpush.msra.mxu0 %v715
    %804 = vmatpush.msra.mxu0 %v713
    %805 = vmatpush.msra.mxu0 %v711
    %806 = vmatpush.msra.mxu0 %v709
    %807 = vmatpush.msra.mxu0 %v707
    %808 = vmatpush.msra.mxu0 %v705
    %809 = vmatmul.f32.gmra.mxu0 %v702
    %v810 = vpop.f32.mrf.mxu0
    %v811 = vadd.f32 %v747, %v810
    %812 = vdwg.mxu0
    %813 = vmatpush.msra.mxu0 0.0
    %814 = vmatpush.msra.mxu0 0.0
    %815 = vmatpush.msra.mxu0 0.0
    %816 = vmatpush.msra.mxu0 0.0
    %817 = vmatpush.msra.mxu0 0.0
    %818 = vmatpush.msra.mxu0 0.0
    %819 = vmatpush.msra.mxu0 0.0
    %820 = vmatpush.msra.mxu0 0.0
    %821 = vmatpush.msra.mxu0 0.0
    %822 = vmatpush.msra.mxu0 0.0
    %823 = vmatpush.msra.mxu0 0.0
    %824 = vmatpush.msra.mxu0 0.0
    %825 = vmatpush.msra.mxu0 %v743
    %826 = vmatpush.msra.mxu0 %v741
    %827 = vmatpush.msra.mxu0 %v739
    %828 = vmatpush.msra.mxu0 %v737
    %829 = vmatmul.f32.gmra.mxu0 %v751
    %v830 = vpop.f32.mrf.mxu0
    %v831 = vadd.f32 %v811, %v830
    %832 = vdwg.mxu0
    %v833 = vmax.f32 %v791, 0.0
    %v834 = vmax.f32 %v831, 0.0
    %v835 = vld [vmem:[%s5] sm:$0xff]
    %v836 = vld [vmem:[%s5 + $0x8] sm:$0xff]
    %v837 = vld [vmem:[%s5 + $0x10] sm:$0xff]
    %v838 = vld [vmem:[%s5 + $0x18] sm:$0xff]
    %v839 = vld [vmem:[%s5 + $0x20] sm:$0xff]
    %v840 = vld [vmem:[%s5 + $0x28] sm:$0xff]
    %v841 = vld [vmem:[%s5 + $0x30] sm:$0xff]
    %v842 = vld [vmem:[%s5 + $0x38] sm:$0xff]
    %v843 = vld [vmem:[%s5 + $0x40] sm:$0xff]
    %v844 = vld [vmem:[%s5 + $0x48] sm:$0xff]
    %v845 = vld [vmem:[%s5 + $0x50] sm:$0xff]
    %v846 = vld [vmem:[%s5 + $0x58] sm:$0xff]
    %v847 = vld [vmem:[%s5 + $0x60] sm:$0xff]
    %v848 = vld [vmem:[%s5 + $0x68] sm:$0xff]
    %v849 = vld [vmem:[%s5 + $0x70] sm:$0xff]
    %v850 = vld [vmem:[%s5 + $0x78] sm:$0xff]
    %v851 = vld [vmem:[%s5 + $0x80] sm:$0xff]
    %v852 = vld [vmem:[%s5 + $0x88] sm:$0xff]
    %v853 = vld [vmem:[%s5 + $0x90] sm:$0xff]
    %v854 = vld [vmem:[%s5 + $0x98] sm:$0xff]
    %v855 = vld [vmem:[%s5 + $0xa0] sm:$0xff]
    %v856 = vld [vmem:[%s5 + $0xa8] sm:$0xff]
    %v857 = vld [vmem:[%s5 + $0xb0] sm:$0xff]
    %v858 = vld [vmem:[%s5 + $0xb8] sm:$0xff]
    %v859 = vld [vmem:[%s5 + $0xc0] sm:$0xff]
    %v860 = vld [vmem:[%s5 + $0xc8] sm:$0xff]
    %v861 = vld [vmem:[%s5 + $0xd0] sm:$0xff]
    %v862 = vld [vmem:[%s5 + $0xd8] sm:$0xff]
    %v863 = vld [vmem:[%s5 + $0xe0] sm:$0xff]
    %v864 = vld [vmem:[%s5 + $0xe8] sm:$0xff]
    %v865 = vld [vmem:[%s5 + $0xf0] sm:$0xff]
    %v866 = vld [vmem:[%s5 + $0xf8] sm:$0xff]
    %v867 = vld [vmem:[%s6] sm:$0x1]
    %v869 = vperm.slane %v867, 0
    %871 = vmatpush.msra.mxu0 %v850
    %872 = vmatpush.msra.mxu0 %v849
    %873 = vmatpush.msra.mxu0 %v848
    %874 = vmatpush.msra.mxu0 %v847
    %875 = vmatpush.msra.mxu0 %v846
    %876 = vmatpush.msra.mxu0 %v845
    %877 = vmatpush.msra.mxu0 %v844
    %878 = vmatpush.msra.mxu0 %v843
    %879 = vmatpush.msra.mxu0 %v842
    %880 = vmatpush.msra.mxu0 %v841
    %881 = vmatpush.msra.mxu0 %v840
    %882 = vmatpush.msra.mxu0 %v839
    %883 = vmatpush.msra.mxu0 %v838
    %884 = vmatpush.msra.mxu0 %v837
    %885 = vmatpush.msra.mxu0 %v836
    %886 = vmatpush.msra.mxu0 %v835
    %887 = vmatmul.f32.gmra.mxu0 %v833
    %v888 = vpop.f32.mrf.mxu0
    %v889 = vadd.f32 %v869, %v888
    %890 = vdwg.mxu0
    %891 = vmatpush.msra.mxu0 %v866
    %892 = vmatpush.msra.mxu0 %v865
    %893 = vmatpush.msra.mxu0 %v864
    %894 = vmatpush.msra.mxu0 %v863
    %895 = vmatpush.msra.mxu0 %v862
    %896 = vmatpush.msra.mxu0 %v861
    %897 = vmatpush.msra.mxu0 %v860
    %898 = vmatpush.msra.mxu0 %v859
    %899 = vmatpush.msra.mxu0 %v858
    %900 = vmatpush.msra.mxu0 %v857
    %901 = vmatpush.msra.mxu0 %v856
    %902 = vmatpush.msra.mxu0 %v855
    %903 = vmatpush.msra.mxu0 %v854
    %904 = vmatpush.msra.mxu0 %v853
    %905 = vmatpush.msra.mxu0 %v852
    %906 = vmatpush.msra.mxu0 %v851
    %907 = vmatmul.f32.gmra.mxu0 %v834
    %v908 = vpop.f32.mrf.mxu0
    %v909 = vadd.f32 %v889, %v908
    %910 = vdwg.mxu0
    %911 = vst [vmem:[%s7] sm:$0xff] %v909
  $region37: #{clipikea_colearn_forward.1} parent=0 // pred_fallthru
    _
  // Predicated region
  $region38: #{clipikea_colearn_forward.1} parent=0 // pred_check
    _
  $region39: #{clipikea_colearn_forward.1} parent=0 // pred_check_branch
    %913 = sbr.rel (0) target = $region41
  $region40: #{clipikea_colearn_forward.1} parent=0 // pred_region
    _
  $region41: #{clipikea_colearn_forward.1} parent=0 // pred_fallthru
    _
  // Predicated region
  $region42: #{clipikea_colearn_forward.1} parent=0 // pred_check
    _
  $region43: #{clipikea_colearn_forward.1} parent=0 // pred_check_branch
    %915 = sbr.rel (0) target = $region45
  $region44: #{clipikea_colearn_forward.1} parent=0 // pred_region
    _
  $region45: #{clipikea_colearn_forward.1} parent=0 // pred_fallthru
    _

</llo_original>
